<compile_context>
chip_gen: v7x
topology: tpu7x:2x2x1
jax: 0.10.0
libtpu: 0.0.40
codegen_flags: <defaults>
</compile_context>

<pallas_src>
import functools

import jax
import jax.numpy as jnp
from jax.experimental import pallas as pl
from jax.experimental.pallas import tpu as pltpu

# ----------------------------------------------------------------------------
# Synthetic network configuration (a small, concrete instantiation of the
# generic YOLO(base, extras, head, feature_layer, num_classes) module).
# feature_layer[0] = [['B'], ['B']]  ->  flattened feature_layer = ['B', 'B'],
# feature_index = [0, 1]; extras are plain conv blocks (no route/concat).
# ----------------------------------------------------------------------------
NUM_CLASSES = 5
NUM_ANCHORS = 2
FEATURE_LAYER_FLAT = ['B', 'B']
FEATURE_INDEX = [0, 1]

# (cin, cout, stride) for each conv block; 3x3 kernels, padding=1 everywhere.
BASE_CFG = [(3, 8, 1), (8, 16, 2), (16, 16, 1)]          # base (conv+LeakyReLU)
EXTRAS_CFG = [(16, 16, 1), (16, 32, 2)]                  # extras (conv+LeakyReLU)
HEAD_IN = [16, 32]                                       # channels feeding each head


# ----------------------------------------------------------------------------
# Pallas kernel: one lane-dense M-tile of  out = epilogue(W @ P + b)
# ----------------------------------------------------------------------------
def _matmul_T_kernel(w_ref, p_ref, b_ref, o_ref, *, negative_slope,
                     softmax_start, num_groups, num_classes):
    # bf16 operands, f32 accumulation on the MXU.
    acc = jnp.dot(w_ref[...], p_ref[...], preferred_element_type=jnp.float32)
    acc = acc + b_ref[...]                                   # (N, TM) + (N, 1)

    if negative_slope is not None:                           # LeakyReLU (f32)
        acc = jnp.where(acc > 0, acc, jnp.float32(negative_slope) * acc)

    if softmax_start is not None:
        # Fused conf softmax: rows [softmax_start:] hold `num_groups` anchors,
        # each `num_classes` consecutive class rows.  Reductions run over the
        # sublane axis; everything stays lane-dense.  Mask-based formulation
        # avoids unaligned sublane slicing/concat.
        row = jax.lax.broadcasted_iota(jnp.int32, acc.shape, 0)
        out = acc
        for g in range(num_groups):
            lo = softmax_start + g * num_classes
            mask = (row >= lo) & (row < lo + num_classes)
            mg = jnp.max(jnp.where(mask, acc, -jnp.inf), axis=0, keepdims=True)
            eg = jnp.where(mask, jnp.exp(jnp.where(mask, acc - mg, 0.0)), 0.0)
            sg = jnp.sum(eg, axis=0, keepdims=True)
            out = jnp.where(mask, eg / sg, out)              # exact division
        acc = out

    o_ref[...] = acc.astype(o_ref.dtype)


def matmul_transposed(w, p, b, *, negative_slope=None, softmax_cfg=None):
    """out = epilogue(w @ p + b);  w:(N,K)  p:(K,M)  b:(N,1)  ->  (N, M_pad) f32.

    M (= B*Ho*Wo pixels) sits on the 128-lane axis, so every load of P and every
    store of the output is lane-dense; the narrow channel count N sits on
    sublanes.  M is zero-padded up to a multiple of 128 (callers slice it back).
    """
    N, K = w.shape
    _, M = p.shape
    M_pad = max(128, ((M + 127) // 128) * 128)
    if M_pad != M:
        p = jnp.pad(p, ((0, 0), (0, M_pad - M)))

    # Tile choice: largest lane-dense tile that still gives >=2 grid steps
    # (v7x megacore) and keeps the double-buffered bf16 P block well under the
    # v7x 32 MiB default scoped-VMEM limit.  Tiny M -> single grid step.
    TM = M_pad
    for cand in (2048, 1024, 512, 256):
        if M_pad % cand == 0 and M_pad // cand >= 2 and (K * cand * 2 * 2) <= (16 << 20):
            TM = cand
            break
    grid = (M_pad // TM,)

    if softmax_cfg is None:
        softmax_start, num_groups, num_classes = None, 0, 0
    else:
        softmax_start, num_groups, num_classes = softmax_cfg

    kernel = functools.partial(
        _matmul_T_kernel, negative_slope=negative_slope,
        softmax_start=softmax_start, num_groups=num_groups,
        num_classes=num_classes)

    return pl.pallas_call(
        kernel,
        out_shape=jax.ShapeDtypeStruct((N, M_pad), jnp.float32),
        grid=grid,
        in_specs=[
            pl.BlockSpec((N, K), lambda i: (0, 0)),   # weights resident in VMEM
            pl.BlockSpec((K, TM), lambda i: (0, i)),  # lane-dense patch tile
            pl.BlockSpec((N, 1), lambda i: (0, 0)),   # bias
        ],
        out_specs=pl.BlockSpec((N, TM), lambda i: (0, i)),
        compiler_params=pltpu.CompilerParams(dimension_semantics=("parallel",)),
    )(w.astype(jnp.bfloat16), p.astype(jnp.bfloat16), b)


# ----------------------------------------------------------------------------
# Conv2d = K-major im2col (plain JAX glue, fused under jit) + Pallas matmul
# ----------------------------------------------------------------------------
def conv_block(x_cf, w_oihw, bias, *, stride=1, padding=1,
               negative_slope=None, softmax_cfg=None):
    """3x3 conv (+ optional LeakyReLU / fused head softmax) on channel-major data.

    x_cf: (Cin, B, H, W).  w: PyTorch layout (Cout, Cin, KH, KW).  bias: (Cout,).
    Returns (Cout, B, Ho, Wo).  Patches are built K-major so the Pallas matmul
    reads (K, M) and writes (Cout, M) with M on the lane axis — no transposes
    are needed between consecutive conv layers.
    """
    Cin, B, H, W = x_cf.shape
    Cout, _, KH, KW = w_oihw.shape
    Ho = (H + 2 * padding - KH) // stride + 1
    Wo = (W + 2 * padding - KW) // stride + 1

    xp = jnp.pad(x_cf, ((0, 0), (0, 0), (padding, padding), (padding, padding)))
    cols = []
    for ky in range(KH):
        for kx in range(KW):
            cols.append(xp[:, :, ky:ky + stride * (Ho - 1) + 1:stride,
                               kx:kx + stride * (Wo - 1) + 1:stride])
    # (Cin, KH*KW, B, Ho, Wo) -> (K, M); K order (ci, ky, kx) matches w.reshape.
    patches = jnp.stack(cols, axis=1).reshape(Cin * KH * KW, B * Ho * Wo)
    wf = w_oihw.reshape(Cout, Cin * KH * KW)
    bf = bias.reshape(Cout, 1)

    out = matmul_transposed(wf, patches, bf, negative_slope=negative_slope,
                            softmax_cfg=softmax_cfg)
    return out[:, :B * Ho * Wo].reshape(Cout, B, Ho, Wo)


# ----------------------------------------------------------------------------
# Deterministic parameter initialization (loc+conf heads fused at init time)
# ----------------------------------------------------------------------------
def _init_conv(key, cin, cout, kh=3, kw=3):
    kw_key, kb_key = jax.random.split(key)
    scale = 1.0 / jnp.sqrt(cin * kh * kw)
    w = jax.random.normal(kw_key, (cout, cin, kh, kw), jnp.float32) * scale
    b = jax.random.normal(kb_key, (cout,), jnp.float32) * 0.01
    return {'w': w, 'b': b}


def init_params(key):
    params = {'base': [], 'extras': [], 'head': []}
    for cin, cout, _ in BASE_CFG:
        key, sub = jax.random.split(key)
        params['base'].append(_init_conv(sub, cin, cout))
    for cin, cout, _ in EXTRAS_CFG:
        key, sub = jax.random.split(key)
        params['extras'].append(_init_conv(sub, cin, cout))
    for cin in HEAD_IN:
        key, s1 = jax.random.split(key)
        loc_p = _init_conv(s1, cin, NUM_ANCHORS * 4)
        key, s2 = jax.random.split(key)
        conf_p = _init_conv(s2, cin, NUM_ANCHORS * NUM_CLASSES)
        # Fused loc+conf head: single conv with Cout = 8 + 10 = 18.
        params['head'].append({
            'w': jnp.concatenate([loc_p['w'], conf_p['w']], axis=0),
            'b': jnp.concatenate([loc_p['b'], conf_p['b']], axis=0),
        })
    return params


# ----------------------------------------------------------------------------
# YOLO forward (mirrors the PyTorch module's forward)
# ----------------------------------------------------------------------------
def yolo_forward(x_nchw, params, phase='eval'):
    # Channel-major activations (C, B, H, W): channels on sublanes, pixels on
    # lanes throughout the network, so every Pallas store stays lane-dense.
    x = jnp.transpose(x_nchw, (1, 0, 2, 3))

    cat = {}
    sources = []
    # base layers (conv + LeakyReLU(0.1))
    for k, (p, (_, _, stride)) in enumerate(zip(params['base'], BASE_CFG)):
        x = conv_block(x, p['w'], p['b'], stride=stride, negative_slope=0.1)
        if k in FEATURE_LAYER_FLAT:     # entries are strings here -> never hit
            cat[k] = x
    # extra layers
    for k, (p, (_, _, stride)) in enumerate(zip(params['extras'], EXTRAS_CFG)):
        if isinstance(FEATURE_LAYER_FLAT[k], int):
            # TODO(synk): route/concat-style extras (v(x, cat[...])) are config
            # specific in the original repo; this synthetic config uses plain convs.
            pass
        x = conv_block(x, p['w'], p['b'], stride=stride, negative_slope=0.1)
        if k in FEATURE_INDEX:
            sources.append(x)

    if phase == 'feature':
        return [jnp.transpose(s, (1, 0, 2, 3)) for s in sources]   # NCHW, like torch

    n_loc = NUM_ANCHORS * 4
    softmax_cfg = (n_loc, NUM_ANCHORS, NUM_CLASSES) if phase == 'eval' else None
    locs, confs = [], []
    for src, hp in zip(sources, params['head']):
        # One fused loc+conf pallas_call per source; conf softmax fused into the
        # kernel epilogue in eval phase.
        out = conv_block(src, hp['w'], hp['b'], stride=1, softmax_cfg=softmax_cfg)
        l = jnp.transpose(out[:n_loc], (1, 2, 3, 0))   # == .permute(0,2,3,1)
        c = jnp.transpose(out[n_loc:], (1, 2, 3, 0))
        locs.append(l.reshape(l.shape[0], -1))
        confs.append(c.reshape(c.shape[0], -1))
    loc = jnp.concatenate(locs, axis=1)
    conf = jnp.concatenate(confs, axis=1)

    if phase == 'eval':
        # softmax already applied per 5-class group inside the head kernel
        return (loc.reshape(loc.shape[0], -1, 4),
                conf.reshape(-1, NUM_CLASSES))
    return (loc.reshape(loc.shape[0], -1, 4),
            conf.reshape(conf.shape[0], -1, NUM_CLASSES))


yolo_forward_jit = jax.jit(yolo_forward, static_argnames=('phase',))


# ----------------------------------------------------------------------------
if __name__ == "__main__":
    key = jax.random.PRNGKey(0)
    key, pkey, xkey = jax.random.split(key, 3)

    params = init_params(pkey)
    x = jax.random.normal(xkey, (2, 3, 16, 16), jnp.float32)   # NCHW like PyTorch

    loc_out, conf_out = yolo_forward_jit(x, params, phase='eval')
    jax.block_until_ready(loc_out)
    jax.block_until_ready(conf_out)

    # sanity: loc (B, num_priors, 4); conf (B*num_priors, num_classes), rows sum to 1
    assert loc_out.shape == (2, 160, 4), loc_out.shape
    assert conf_out.shape == (320, NUM_CLASSES), conf_out.shape
    assert bool(jnp.allclose(jnp.sum(conf_out, axis=-1), 1.0, atol=1e-5))

    print("KERNEL_OK")
</pallas_src>

<mosaic_0001>
module attributes {stable_mosaic.version = 11 : i64} {
  func.func @_matmul_T_kernel(%arg0: i32, %arg1: memref<8x27xbf16, #tpu.memory_space<vmem>>, %arg2: memref<27x256xbf16, #tpu.memory_space<vmem>>, %arg3: memref<8x1xf32, #tpu.memory_space<vmem>>, %arg4: memref<8x256xf32, #tpu.memory_space<vmem>>) attributes {dimension_semantics = [#tpu.dimension_semantics<parallel>], iteration_bounds = array<i64: 2>, scalar_prefetch = 0 : i64, scratch_operands = 0 : i64, tpu.core_type = #tpu.core_type<tc>, window_params = [{pipeline_mode = #tpu.pipeline_mode<synchronous>, transform_indices = @transform_0, window_bounds = array<i64: 8, 27>}, {transform_indices = @transform_1, window_bounds = array<i64: 27, 256>}, {pipeline_mode = #tpu.pipeline_mode<synchronous>, transform_indices = @transform_2, window_bounds = array<i64: 8, 1>}, {transform_indices = @transform_3, window_bounds = array<i64: 8, 256>}]} {
    %c0 = arith.constant 0 : index
    %c0_0 = arith.constant 0 : index
    %0 = vector.load %arg1[%c0, %c0_0] : memref<8x27xbf16, #tpu.memory_space<vmem>>, vector<8x27xbf16>
    %c0_1 = arith.constant 0 : index
    %c0_2 = arith.constant 0 : index
    %1 = vector.load %arg2[%c0_1, %c0_2] : memref<27x256xbf16, #tpu.memory_space<vmem>>, vector<27x256xbf16>
    %cst = arith.constant dense<0.000000e+00> : vector<8x256xf32>
    %2 = tpu.matmul %0, %1, %cst {dimension_numbers = #tpu.dot_dimension_numbers<[1], [0], [0], [1], [0, 0, 1, 1], [], []>} : vector<8x27xbf16>, vector<27x256xbf16>, vector<8x256xf32> -> vector<8x256xf32>
    %c0_3 = arith.constant 0 : index
    %c0_4 = arith.constant 0 : index
    %3 = vector.load %arg3[%c0_3, %c0_4] : memref<8x1xf32, #tpu.memory_space<vmem>>, vector<8x1xf32>
    %4 = vector.broadcast %3 : vector<8x1xf32> to vector<8x256xf32>
    %5 = arith.addf %2, %4 : vector<8x256xf32>
    %cst_5 = arith.constant 0.000000e+00 : f32
    %6 = vector.broadcast %cst_5 : f32 to vector<8x256xf32>
    %7 = arith.cmpf ogt, %5, %6 : vector<8x256xf32>
    %cst_6 = arith.constant 1.000000e-01 : f32
    %8 = vector.broadcast %cst_6 : f32 to vector<8x256xf32>
    %9 = arith.mulf %8, %5 : vector<8x256xf32>
    %10 = arith.select %7, %5, %9 : vector<8x256xi1>, vector<8x256xf32>
    %c0_7 = arith.constant 0 : index
    %c0_8 = arith.constant 0 : index
    %11 = vector.load %arg4[%c0_7, %c0_8] : memref<8x256xf32, #tpu.memory_space<vmem>>, vector<8x256xf32>
    tpu.vector_store %arg4[%c0_7, %c0_8], %10 {strides = array<i32>} : memref<8x256xf32, #tpu.memory_space<vmem>>, vector<8x256xf32>,
    return
  }
  func.func @transform_0(%arg0: i32) -> (i32, i32) {
    %c0_i32 = arith.constant 0 : i32
    %c0_i32_0 = arith.constant 0 : i32
    %c0_i32_1 = arith.constant 0 : i32
    return %c0_i32, %c0_i32_0 : i32, i32
  }
  func.func @transform_1(%arg0: i32) -> (i32, i32) {
    %c0_i32 = arith.constant 0 : i32
    %c0_i32_0 = arith.constant 0 : i32
    return %c0_i32, %arg0 : i32, i32
  }
  func.func @transform_2(%arg0: i32) -> (i32, i32) {
    %c0_i32 = arith.constant 0 : i32
    %c0_i32_0 = arith.constant 0 : i32
    %c0_i32_1 = arith.constant 0 : i32
    return %c0_i32, %c0_i32_0 : i32, i32
  }
  func.func @transform_3(%arg0: i32) -> (i32, i32) {
    %c0_i32 = arith.constant 0 : i32
    %c0_i32_0 = arith.constant 0 : i32
    return %c0_i32, %arg0 : i32, i32
  }
}

module attributes {stable_mosaic.version = 11 : i64} {
  func.func @_matmul_T_kernel(%arg0: i32, %arg1: memref<16x72xbf16, #tpu.memory_space<vmem>>, %arg2: memref<72x128xbf16, #tpu.memory_space<vmem>>, %arg3: memref<16x1xf32, #tpu.memory_space<vmem>>, %arg4: memref<16x128xf32, #tpu.memory_space<vmem>>) attributes {dimension_semantics = [#tpu.dimension_semantics<parallel>], iteration_bounds = array<i64: 1>, scalar_prefetch = 0 : i64, scratch_operands = 0 : i64, tpu.core_type = #tpu.core_type<tc>, window_params = [{pipeline_mode = #tpu.pipeline_mode<synchronous>, transform_indices = @transform_0, window_bounds = array<i64: 16, 72>}, {transform_indices = @transform_1, window_bounds = array<i64: 72, 128>}, {pipeline_mode = #tpu.pipeline_mode<synchronous>, transform_indices = @transform_2, window_bounds = array<i64: 16, 1>}, {transform_indices = @transform_3, window_bounds = array<i64: 16, 128>}]} {
    %c0 = arith.constant 0 : index
    %c0_0 = arith.constant 0 : index
    %0 = vector.load %arg1[%c0, %c0_0] : memref<16x72xbf16, #tpu.memory_space<vmem>>, vector<16x72xbf16>
    %c0_1 = arith.constant 0 : index
    %c0_2 = arith.constant 0 : index
    %1 = vector.load %arg2[%c0_1, %c0_2] : memref<72x128xbf16, #tpu.memory_space<vmem>>, vector<72x128xbf16>
    %cst = arith.constant dense<0.000000e+00> : vector<16x128xf32>
    %2 = tpu.matmul %0, %1, %cst {dimension_numbers = #tpu.dot_dimension_numbers<[1], [0], [0], [1], [0, 0, 1, 1], [], []>} : vector<16x72xbf16>, vector<72x128xbf16>, vector<16x128xf32> -> vector<16x128xf32>
    %c0_3 = arith.constant 0 : index
    %c0_4 = arith.constant 0 : index
    %3 = vector.load %arg3[%c0_3, %c0_4] : memref<16x1xf32, #tpu.memory_space<vmem>>, vector<16x1xf32>
    %4 = vector.broadcast %3 : vector<16x1xf32> to vector<16x128xf32>
    %5 = arith.addf %2, %4 : vector<16x128xf32>
    %cst_5 = arith.constant 0.000000e+00 : f32
    %6 = vector.broadcast %cst_5 : f32 to vector<16x128xf32>
    %7 = arith.cmpf ogt, %5, %6 : vector<16x128xf32>
    %cst_6 = arith.constant 1.000000e-01 : f32
    %8 = vector.broadcast %cst_6 : f32 to vector<16x128xf32>
    %9 = arith.mulf %8, %5 : vector<16x128xf32>
    %10 = arith.select %7, %5, %9 : vector<16x128xi1>, vector<16x128xf32>
    %c0_7 = arith.constant 0 : index
    %c0_8 = arith.constant 0 : index
    %11 = vector.load %arg4[%c0_7, %c0_8] : memref<16x128xf32, #tpu.memory_space<vmem>>, vector<16x128xf32>
    tpu.vector_store %arg4[%c0_7, %c0_8], %10 {strides = array<i32>} : memref<16x128xf32, #tpu.memory_space<vmem>>, vector<16x128xf32>,
    return
  }
  func.func @transform_0(%arg0: i32) -> (i32, i32) {
    %c0_i32 = arith.constant 0 : i32
    %c0_i32_0 = arith.constant 0 : i32
    %c0_i32_1 = arith.constant 0 : i32
    return %c0_i32, %c0_i32_0 : i32, i32
  }
  func.func @transform_1(%arg0: i32) -> (i32, i32) {
    %c0_i32 = arith.constant 0 : i32
    %c0_i32_0 = arith.constant 0 : i32
    return %c0_i32, %arg0 : i32, i32
  }
  func.func @transform_2(%arg0: i32) -> (i32, i32) {
    %c0_i32 = arith.constant 0 : i32
    %c0_i32_0 = arith.constant 0 : i32
    %c0_i32_1 = arith.constant 0 : i32
    return %c0_i32, %c0_i32_0 : i32, i32
  }
  func.func @transform_3(%arg0: i32) -> (i32, i32) {
    %c0_i32 = arith.constant 0 : i32
    %c0_i32_0 = arith.constant 0 : i32
    return %c0_i32, %arg0 : i32, i32
  }
}

module attributes {stable_mosaic.version = 11 : i64} {
  func.func @_matmul_T_kernel(%arg0: i32, %arg1: memref<16x144xbf16, #tpu.memory_space<vmem>>, %arg2: memref<144x128xbf16, #tpu.memory_space<vmem>>, %arg3: memref<16x1xf32, #tpu.memory_space<vmem>>, %arg4: memref<16x128xf32, #tpu.memory_space<vmem>>) attributes {dimension_semantics = [#tpu.dimension_semantics<parallel>], iteration_bounds = array<i64: 1>, scalar_prefetch = 0 : i64, scratch_operands = 0 : i64, tpu.core_type = #tpu.core_type<tc>, window_params = [{pipeline_mode = #tpu.pipeline_mode<synchronous>, transform_indices = @transform_0, window_bounds = array<i64: 16, 144>}, {transform_indices = @transform_1, window_bounds = array<i64: 144, 128>}, {pipeline_mode = #tpu.pipeline_mode<synchronous>, transform_indices = @transform_2, window_bounds = array<i64: 16, 1>}, {transform_indices = @transform_3, window_bounds = array<i64: 16, 128>}]} {
    %c0 = arith.constant 0 : index
    %c0_0 = arith.constant 0 : index
    %0 = vector.load %arg1[%c0, %c0_0] : memref<16x144xbf16, #tpu.memory_space<vmem>>, vector<16x144xbf16>
    %c0_1 = arith.constant 0 : index
    %c0_2 = arith.constant 0 : index
    %1 = vector.load %arg2[%c0_1, %c0_2] : memref<144x128xbf16, #tpu.memory_space<vmem>>, vector<144x128xbf16>
    %cst = arith.constant dense<0.000000e+00> : vector<16x128xf32>
    %2 = tpu.matmul %0, %1, %cst {dimension_numbers = #tpu.dot_dimension_numbers<[1], [0], [0], [1], [0, 0, 1, 1], [], []>} : vector<16x144xbf16>, vector<144x128xbf16>, vector<16x128xf32> -> vector<16x128xf32>
    %c0_3 = arith.constant 0 : index
    %c0_4 = arith.constant 0 : index
    %3 = vector.load %arg3[%c0_3, %c0_4] : memref<16x1xf32, #tpu.memory_space<vmem>>, vector<16x1xf32>
    %4 = vector.broadcast %3 : vector<16x1xf32> to vector<16x128xf32>
    %5 = arith.addf %2, %4 : vector<16x128xf32>
    %cst_5 = arith.constant 0.000000e+00 : f32
    %6 = vector.broadcast %cst_5 : f32 to vector<16x128xf32>
    %7 = arith.cmpf ogt, %5, %6 : vector<16x128xf32>
    %cst_6 = arith.constant 1.000000e-01 : f32
    %8 = vector.broadcast %cst_6 : f32 to vector<16x128xf32>
    %9 = arith.mulf %8, %5 : vector<16x128xf32>
    %10 = arith.select %7, %5, %9 : vector<16x128xi1>, vector<16x128xf32>
    %c0_7 = arith.constant 0 : index
    %c0_8 = arith.constant 0 : index
    %11 = vector.load %arg4[%c0_7, %c0_8] : memref<16x128xf32, #tpu.memory_space<vmem>>, vector<16x128xf32>
    tpu.vector_store %arg4[%c0_7, %c0_8], %10 {strides = array<i32>} : memref<16x128xf32, #tpu.memory_space<vmem>>, vector<16x128xf32>,
    return
  }
  func.func @transform_0(%arg0: i32) -> (i32, i32) {
    %c0_i32 = arith.constant 0 : i32
    %c0_i32_0 = arith.constant 0 : i32
    %c0_i32_1 = arith.constant 0 : i32
    return %c0_i32, %c0_i32_0 : i32, i32
  }
  func.func @transform_1(%arg0: i32) -> (i32, i32) {
    %c0_i32 = arith.constant 0 : i32
    %c0_i32_0 = arith.constant 0 : i32
    return %c0_i32, %arg0 : i32, i32
  }
  func.func @transform_2(%arg0: i32) -> (i32, i32) {
    %c0_i32 = arith.constant 0 : i32
    %c0_i32_0 = arith.constant 0 : i32
    %c0_i32_1 = arith.constant 0 : i32
    return %c0_i32, %c0_i32_0 : i32, i32
  }
  func.func @transform_3(%arg0: i32) -> (i32, i32) {
    %c0_i32 = arith.constant 0 : i32
    %c0_i32_0 = arith.constant 0 : i32
    return %c0_i32, %arg0 : i32, i32
  }
}

module attributes {stable_mosaic.version = 11 : i64} {
  func.func @_matmul_T_kernel(%arg0: i32, %arg1: memref<32x144xbf16, #tpu.memory_space<vmem>>, %arg2: memref<144x128xbf16, #tpu.memory_space<vmem>>, %arg3: memref<32x1xf32, #tpu.memory_space<vmem>>, %arg4: memref<32x128xf32, #tpu.memory_space<vmem>>) attributes {dimension_semantics = [#tpu.dimension_semantics<parallel>], iteration_bounds = array<i64: 1>, scalar_prefetch = 0 : i64, scratch_operands = 0 : i64, tpu.core_type = #tpu.core_type<tc>, window_params = [{pipeline_mode = #tpu.pipeline_mode<synchronous>, transform_indices = @transform_0, window_bounds = array<i64: 32, 144>}, {transform_indices = @transform_1, window_bounds = array<i64: 144, 128>}, {pipeline_mode = #tpu.pipeline_mode<synchronous>, transform_indices = @transform_2, window_bounds = array<i64: 32, 1>}, {transform_indices = @transform_3, window_bounds = array<i64: 32, 128>}]} {
    %c0 = arith.constant 0 : index
    %c0_0 = arith.constant 0 : index
    %0 = vector.load %arg1[%c0, %c0_0] : memref<32x144xbf16, #tpu.memory_space<vmem>>, vector<32x144xbf16>
    %c0_1 = arith.constant 0 : index
    %c0_2 = arith.constant 0 : index
    %1 = vector.load %arg2[%c0_1, %c0_2] : memref<144x128xbf16, #tpu.memory_space<vmem>>, vector<144x128xbf16>
    %cst = arith.constant dense<0.000000e+00> : vector<32x128xf32>
    %2 = tpu.matmul %0, %1, %cst {dimension_numbers = #tpu.dot_dimension_numbers<[1], [0], [0], [1], [0, 0, 1, 1], [], []>} : vector<32x144xbf16>, vector<144x128xbf16>, vector<32x128xf32> -> vector<32x128xf32>
    %c0_3 = arith.constant 0 : index
    %c0_4 = arith.constant 0 : index
    %3 = vector.load %arg3[%c0_3, %c0_4] : memref<32x1xf32, #tpu.memory_space<vmem>>, vector<32x1xf32>
    %4 = vector.broadcast %3 : vector<32x1xf32> to vector<32x128xf32>
    %5 = arith.addf %2, %4 : vector<32x128xf32>
    %cst_5 = arith.constant 0.000000e+00 : f32
    %6 = vector.broadcast %cst_5 : f32 to vector<32x128xf32>
    %7 = arith.cmpf ogt, %5, %6 : vector<32x128xf32>
    %cst_6 = arith.constant 1.000000e-01 : f32
    %8 = vector.broadcast %cst_6 : f32 to vector<32x128xf32>
    %9 = arith.mulf %8, %5 : vector<32x128xf32>
    %10 = arith.select %7, %5, %9 : vector<32x128xi1>, vector<32x128xf32>
    %c0_7 = arith.constant 0 : index
    %c0_8 = arith.constant 0 : index
    %11 = vector.load %arg4[%c0_7, %c0_8] : memref<32x128xf32, #tpu.memory_space<vmem>>, vector<32x128xf32>
    tpu.vector_store %arg4[%c0_7, %c0_8], %10 {strides = array<i32>} : memref<32x128xf32, #tpu.memory_space<vmem>>, vector<32x128xf32>,
    return
  }
  func.func @transform_0(%arg0: i32) -> (i32, i32) {
    %c0_i32 = arith.constant 0 : i32
    %c0_i32_0 = arith.constant 0 : i32
    %c0_i32_1 = arith.constant 0 : i32
    return %c0_i32, %c0_i32_0 : i32, i32
  }
  func.func @transform_1(%arg0: i32) -> (i32, i32) {
    %c0_i32 = arith.constant 0 : i32
    %c0_i32_0 = arith.constant 0 : i32
    return %c0_i32, %arg0 : i32, i32
  }
  func.func @transform_2(%arg0: i32) -> (i32, i32) {
    %c0_i32 = arith.constant 0 : i32
    %c0_i32_0 = arith.constant 0 : i32
    %c0_i32_1 = arith.constant 0 : i32
    return %c0_i32, %c0_i32_0 : i32, i32
  }
  func.func @transform_3(%arg0: i32) -> (i32, i32) {
    %c0_i32 = arith.constant 0 : i32
    %c0_i32_0 = arith.constant 0 : i32
    return %c0_i32, %arg0 : i32, i32
  }
}

module attributes {stable_mosaic.version = 11 : i64} {
  func.func @_matmul_T_kernel(%arg0: i32, %arg1: memref<18x288xbf16, #tpu.memory_space<vmem>>, %arg2: memref<288x128xbf16, #tpu.memory_space<vmem>>, %arg3: memref<18x1xf32, #tpu.memory_space<vmem>>, %arg4: memref<18x128xf32, #tpu.memory_space<vmem>>) attributes {dimension_semantics = [#tpu.dimension_semantics<parallel>], iteration_bounds = array<i64: 1>, scalar_prefetch = 0 : i64, scratch_operands = 0 : i64, tpu.core_type = #tpu.core_type<tc>, window_params = [{pipeline_mode = #tpu.pipeline_mode<synchronous>, transform_indices = @transform_0, window_bounds = array<i64: 18, 288>}, {transform_indices = @transform_1, window_bounds = array<i64: 288, 128>}, {pipeline_mode = #tpu.pipeline_mode<synchronous>, transform_indices = @transform_2, window_bounds = array<i64: 18, 1>}, {transform_indices = @transform_3, window_bounds = array<i64: 18, 128>}]} {
    %c0 = arith.constant 0 : index
    %c0_0 = arith.constant 0 : index
    %0 = vector.load %arg1[%c0, %c0_0] : memref<18x288xbf16, #tpu.memory_space<vmem>>, vector<18x288xbf16>
    %c0_1 = arith.constant 0 : index
    %c0_2 = arith.constant 0 : index
    %1 = vector.load %arg2[%c0_1, %c0_2] : memref<288x128xbf16, #tpu.memory_space<vmem>>, vector<288x128xbf16>
    %cst = arith.constant dense<0.000000e+00> : vector<18x128xf32>
    %2 = tpu.matmul %0, %1, %cst {dimension_numbers = #tpu.dot_dimension_numbers<[1], [0], [0], [1], [0, 0, 1, 1], [], []>} : vector<18x288xbf16>, vector<288x128xbf16>, vector<18x128xf32> -> vector<18x128xf32>
    %c0_3 = arith.constant 0 : index
    %c0_4 = arith.constant 0 : index
    %3 = vector.load %arg3[%c0_3, %c0_4] : memref<18x1xf32, #tpu.memory_space<vmem>>, vector<18x1xf32>
    %4 = vector.broadcast %3 : vector<18x1xf32> to vector<18x128xf32>
    %5 = arith.addf %2, %4 : vector<18x128xf32>
    %6 = tpu.iota {dimensions = array<i32: 0>} : vector<18x128xi32>
    %c8_i32 = arith.constant 8 : i32
    %7 = vector.broadcast %c8_i32 : i32 to vector<18x128xi32>
    %8 = arith.cmpi sge, %6, %7 : vector<18x128xi32>
    %c13_i32 = arith.constant 13 : i32
    %9 = vector.broadcast %c13_i32 : i32 to vector<18x128xi32>
    %10 = arith.cmpi slt, %6, %9 : vector<18x128xi32>
    %11 = arith.andi %8, %10 : vector<18x128xi1>
    %cst_5 = arith.constant 0xFF800000 : f32
    %12 = vector.broadcast %cst_5 : f32 to vector<18x128xf32>
    %13 = arith.select %11, %5, %12 : vector<18x128xi1>, vector<18x128xf32>
    %cst_6 = arith.constant dense<0xFF800000> : vector<128xf32>
    %14 = vector.multi_reduction <maximumf>, %13, %cst_6 [0] : vector<18x128xf32> to vector<128xf32>
    %15 = vector.shape_cast %14 : vector<128xf32> to vector<1x128xf32>
    %16 = vector.broadcast %15 : vector<1x128xf32> to vector<18x128xf32>
    %17 = arith.subf %5, %16 : vector<18x128xf32>
    %cst_7 = arith.constant 0.000000e+00 : f32
    %18 = vector.broadcast %cst_7 : f32 to vector<18x128xf32>
    %19 = arith.select %11, %17, %18 : vector<18x128xi1>, vector<18x128xf32>
    %20 = math.exp %19 : vector<18x128xf32>
    %cst_8 = arith.constant 0.000000e+00 : f32
    %21 = vector.broadcast %cst_8 : f32 to vector<18x128xf32>
    %22 = arith.select %11, %20, %21 : vector<18x128xi1>, vector<18x128xf32>
    %cst_9 = arith.constant dense<0.000000e+00> : vector<128xf32>
    %23 = vector.multi_reduction <add>, %22, %cst_9 [0] : vector<18x128xf32> to vector<128xf32>
    %24 = vector.shape_cast %23 : vector<128xf32> to vector<1x128xf32>
    %25 = vector.broadcast %24 : vector<1x128xf32> to vector<18x128xf32>
    %26 = arith.divf %22, %25 : vector<18x128xf32>
    %27 = arith.select %11, %26, %5 : vector<18x128xi1>, vector<18x128xf32>
    %c13_i32_10 = arith.constant 13 : i32
    %28 = vector.broadcast %c13_i32_10 : i32 to vector<18x128xi32>
    %29 = arith.cmpi sge, %6, %28 : vector<18x128xi32>
    %c18_i32 = arith.constant 18 : i32
    %30 = vector.broadcast %c18_i32 : i32 to vector<18x128xi32>
    %31 = arith.cmpi slt, %6, %30 : vector<18x128xi32>
    %32 = arith.andi %29, %31 : vector<18x128xi1>
    %cst_11 = arith.constant 0xFF800000 : f32
    %33 = vector.broadcast %cst_11 : f32 to vector<18x128xf32>
    %34 = arith.select %32, %5, %33 : vector<18x128xi1>, vector<18x128xf32>
    %cst_12 = arith.constant dense<0xFF800000> : vector<128xf32>
    %35 = vector.multi_reduction <maximumf>, %34, %cst_12 [0] : vector<18x128xf32> to vector<128xf32>
    %36 = vector.shape_cast %35 : vector<128xf32> to vector<1x128xf32>
    %37 = vector.broadcast %36 : vector<1x128xf32> to vector<18x128xf32>
    %38 = arith.subf %5, %37 : vector<18x128xf32>
    %cst_13 = arith.constant 0.000000e+00 : f32
    %39 = vector.broadcast %cst_13 : f32 to vector<18x128xf32>
    %40 = arith.select %32, %38, %39 : vector<18x128xi1>, vector<18x128xf32>
    %41 = math.exp %40 : vector<18x128xf32>
    %cst_14 = arith.constant 0.000000e+00 : f32
    %42 = vector.broadcast %cst_14 : f32 to vector<18x128xf32>
    %43 = arith.select %32, %41, %42 : vector<18x128xi1>, vector<18x128xf32>
    %cst_15 = arith.constant dense<0.000000e+00> : vector<128xf32>
    %44 = vector.multi_reduction <add>, %43, %cst_15 [0] : vector<18x128xf32> to vector<128xf32>
    %45 = vector.shape_cast %44 : vector<128xf32> to vector<1x128xf32>
    %46 = vector.broadcast %45 : vector<1x128xf32> to vector<18x128xf32>
    %47 = arith.divf %43, %46 : vector<18x128xf32>
    %48 = arith.select %32, %47, %27 : vector<18x128xi1>, vector<18x128xf32>
    %c0_16 = arith.constant 0 : index
    %c0_17 = arith.constant 0 : index
    %49 = vector.load %arg4[%c0_16, %c0_17] : memref<18x128xf32, #tpu.memory_space<vmem>>, vector<18x128xf32>
    tpu.vector_store %arg4[%c0_16, %c0_17], %48 {strides = array<i32>} : memref<18x128xf32, #tpu.memory_space<vmem>>, vector<18x128xf32>,
    return
  }
  func.func @transform_0(%arg0: i32) -> (i32, i32) {
    %c0_i32 = arith.constant 0 : i32
    %c0_i32_0 = arith.constant 0 : i32
    %c0_i32_1 = arith.constant 0 : i32
    return %c0_i32, %c0_i32_0 : i32, i32
  }
  func.func @transform_1(%arg0: i32) -> (i32, i32) {
    %c0_i32 = arith.constant 0 : i32
    %c0_i32_0 = arith.constant 0 : i32
    return %c0_i32, %arg0 : i32, i32
  }
  func.func @transform_2(%arg0: i32) -> (i32, i32) {
    %c0_i32 = arith.constant 0 : i32
    %c0_i32_0 = arith.constant 0 : i32
    %c0_i32_1 = arith.constant 0 : i32
    return %c0_i32, %c0_i32_0 : i32, i32
  }
  func.func @transform_3(%arg0: i32) -> (i32, i32) {
    %c0_i32 = arith.constant 0 : i32
    %c0_i32_0 = arith.constant 0 : i32
    return %c0_i32, %arg0 : i32, i32
  }
}

module attributes {stable_mosaic.version = 11 : i64} {
  func.func @_matmul_T_kernel(%arg0: i32, %arg1: memref<18x144xbf16, #tpu.memory_space<vmem>>, %arg2: memref<144x128xbf16, #tpu.memory_space<vmem>>, %arg3: memref<18x1xf32, #tpu.memory_space<vmem>>, %arg4: memref<18x128xf32, #tpu.memory_space<vmem>>) attributes {dimension_semantics = [#tpu.dimension_semantics<parallel>], iteration_bounds = array<i64: 1>, scalar_prefetch = 0 : i64, scratch_operands = 0 : i64, tpu.core_type = #tpu.core_type<tc>, window_params = [{pipeline_mode = #tpu.pipeline_mode<synchronous>, transform_indices = @transform_0, window_bounds = array<i64: 18, 144>}, {transform_indices = @transform_1, window_bounds = array<i64: 144, 128>}, {pipeline_mode = #tpu.pipeline_mode<synchronous>, transform_indices = @transform_2, window_bounds = array<i64: 18, 1>}, {transform_indices = @transform_3, window_bounds = array<i64: 18, 128>}]} {
    %c0 = arith.constant 0 : index
    %c0_0 = arith.constant 0 : index
    %0 = vector.load %arg1[%c0, %c0_0] : memref<18x144xbf16, #tpu.memory_space<vmem>>, vector<18x144xbf16>
    %c0_1 = arith.constant 0 : index
    %c0_2 = arith.constant 0 : index
    %1 = vector.load %arg2[%c0_1, %c0_2] : memref<144x128xbf16, #tpu.memory_space<vmem>>, vector<144x128xbf16>
    %cst = arith.constant dense<0.000000e+00> : vector<18x128xf32>
    %2 = tpu.matmul %0, %1, %cst {dimension_numbers = #tpu.dot_dimension_numbers<[1], [0], [0], [1], [0, 0, 1, 1], [], []>} : vector<18x144xbf16>, vector<144x128xbf16>, vector<18x128xf32> -> vector<18x128xf32>
    %c0_3 = arith.constant 0 : index
    %c0_4 = arith.constant 0 : index
    %3 = vector.load %arg3[%c0_3, %c0_4] : memref<18x1xf32, #tpu.memory_space<vmem>>, vector<18x1xf32>
    %4 = vector.broadcast %3 : vector<18x1xf32> to vector<18x128xf32>
    %5 = arith.addf %2, %4 : vector<18x128xf32>
    %6 = tpu.iota {dimensions = array<i32: 0>} : vector<18x128xi32>
    %c8_i32 = arith.constant 8 : i32
    %7 = vector.broadcast %c8_i32 : i32 to vector<18x128xi32>
    %8 = arith.cmpi sge, %6, %7 : vector<18x128xi32>
    %c13_i32 = arith.constant 13 : i32
    %9 = vector.broadcast %c13_i32 : i32 to vector<18x128xi32>
    %10 = arith.cmpi slt, %6, %9 : vector<18x128xi32>
    %11 = arith.andi %8, %10 : vector<18x128xi1>
    %cst_5 = arith.constant 0xFF800000 : f32
    %12 = vector.broadcast %cst_5 : f32 to vector<18x128xf32>
    %13 = arith.select %11, %5, %12 : vector<18x128xi1>, vector<18x128xf32>
    %cst_6 = arith.constant dense<0xFF800000> : vector<128xf32>
    %14 = vector.multi_reduction <maximumf>, %13, %cst_6 [0] : vector<18x128xf32> to vector<128xf32>
    %15 = vector.shape_cast %14 : vector<128xf32> to vector<1x128xf32>
    %16 = vector.broadcast %15 : vector<1x128xf32> to vector<18x128xf32>
    %17 = arith.subf %5, %16 : vector<18x128xf32>
    %cst_7 = arith.constant 0.000000e+00 : f32
    %18 = vector.broadcast %cst_7 : f32 to vector<18x128xf32>
    %19 = arith.select %11, %17, %18 : vector<18x128xi1>, vector<18x128xf32>
    %20 = math.exp %19 : vector<18x128xf32>
    %cst_8 = arith.constant 0.000000e+00 : f32
    %21 = vector.broadcast %cst_8 : f32 to vector<18x128xf32>
    %22 = arith.select %11, %20, %21 : vector<18x128xi1>, vector<18x128xf32>
    %cst_9 = arith.constant dense<0.000000e+00> : vector<128xf32>
    %23 = vector.multi_reduction <add>, %22, %cst_9 [0] : vector<18x128xf32> to vector<128xf32>
    %24 = vector.shape_cast %23 : vector<128xf32> to vector<1x128xf32>
    %25 = vector.broadcast %24 : vector<1x128xf32> to vector<18x128xf32>
    %26 = arith.divf %22, %25 : vector<18x128xf32>
    %27 = arith.select %11, %26, %5 : vector<18x128xi1>, vector<18x128xf32>
    %c13_i32_10 = arith.constant 13 : i32
    %28 = vector.broadcast %c13_i32_10 : i32 to vector<18x128xi32>
    %29 = arith.cmpi sge, %6, %28 : vector<18x128xi32>
    %c18_i32 = arith.constant 18 : i32
    %30 = vector.broadcast %c18_i32 : i32 to vector<18x128xi32>
    %31 = arith.cmpi slt, %6, %30 : vector<18x128xi32>
    %32 = arith.andi %29, %31 : vector<18x128xi1>
    %cst_11 = arith.constant 0xFF800000 : f32
    %33 = vector.broadcast %cst_11 : f32 to vector<18x128xf32>
    %34 = arith.select %32, %5, %33 : vector<18x128xi1>, vector<18x128xf32>
    %cst_12 = arith.constant dense<0xFF800000> : vector<128xf32>
    %35 = vector.multi_reduction <maximumf>, %34, %cst_12 [0] : vector<18x128xf32> to vector<128xf32>
    %36 = vector.shape_cast %35 : vector<128xf32> to vector<1x128xf32>
    %37 = vector.broadcast %36 : vector<1x128xf32> to vector<18x128xf32>
    %38 = arith.subf %5, %37 : vector<18x128xf32>
    %cst_13 = arith.constant 0.000000e+00 : f32
    %39 = vector.broadcast %cst_13 : f32 to vector<18x128xf32>
    %40 = arith.select %32, %38, %39 : vector<18x128xi1>, vector<18x128xf32>
    %41 = math.exp %40 : vector<18x128xf32>
    %cst_14 = arith.constant 0.000000e+00 : f32
    %42 = vector.broadcast %cst_14 : f32 to vector<18x128xf32>
    %43 = arith.select %32, %41, %42 : vector<18x128xi1>, vector<18x128xf32>
    %cst_15 = arith.constant dense<0.000000e+00> : vector<128xf32>
    %44 = vector.multi_reduction <add>, %43, %cst_15 [0] : vector<18x128xf32> to vector<128xf32>
    %45 = vector.shape_cast %44 : vector<128xf32> to vector<1x128xf32>
    %46 = vector.broadcast %45 : vector<1x128xf32> to vector<18x128xf32>
    %47 = arith.divf %43, %46 : vector<18x128xf32>
    %48 = arith.select %32, %47, %27 : vector<18x128xi1>, vector<18x128xf32>
    %c0_16 = arith.constant 0 : index
    %c0_17 = arith.constant 0 : index
    %49 = vector.load %arg4[%c0_16, %c0_17] : memref<18x128xf32, #tpu.memory_space<vmem>>, vector<18x128xf32>
    tpu.vector_store %arg4[%c0_16, %c0_17], %48 {strides = array<i32>} : memref<18x128xf32, #tpu.memory_space<vmem>>, vector<18x128xf32>,
    return
  }
  func.func @transform_0(%arg0: i32) -> (i32, i32) {
    %c0_i32 = arith.constant 0 : i32
    %c0_i32_0 = arith.constant 0 : i32
    %c0_i32_1 = arith.constant 0 : i32
    return %c0_i32, %c0_i32_0 : i32, i32
  }
  func.func @transform_1(%arg0: i32) -> (i32, i32) {
    %c0_i32 = arith.constant 0 : i32
    %c0_i32_0 = arith.constant 0 : i32
    return %c0_i32, %arg0 : i32, i32
  }
  func.func @transform_2(%arg0: i32) -> (i32, i32) {
    %c0_i32 = arith.constant 0 : i32
    %c0_i32_0 = arith.constant 0 : i32
    %c0_i32_1 = arith.constant 0 : i32
    return %c0_i32, %c0_i32_0 : i32, i32
  }
  func.func @transform_3(%arg0: i32) -> (i32, i32) {
    %c0_i32 = arith.constant 0 : i32
    %c0_i32_0 = arith.constant 0 : i32
    return %c0_i32, %arg0 : i32, i32
  }
}

</mosaic_0001>

<llo_original>
// kernel: yolo_forward.7
$region0: #{yolo_forward.7}
  #allocation0 [shape = 'u32[]', space=smem, size = 0x4, offset = 0x4, fixed_abs, tag = 'smem constant byte address 0x4 - core index']
  #allocation1 [shape = 'u32[144,128]{1,0:T(1,128)}', space=vmem, size = 0x12000, scoped, tag = 'internal scratch']
  %s0 = inlined_call_operand.vmem [shape: bf16[8,27], index: 0, kind: input, shape index: {}]
  %s1 = inlined_call_operand.vmem [shape: bf16[27,512], index: 1, kind: input, shape index: {}]
  %s2 = inlined_call_operand.vmem [shape: f32[8,1], index: 2, kind: input, shape index: {}]
  %s3 = inlined_call_operand.vmem [shape: f32[8,512], index: 3, kind: output, shape index: {}]
  %s4 = sld [smem:[#allocation0]]
  $region83: #{yolo_forward.7} parent=0
    _
  %s6 = ssub.s32 1, %s4
  %s7 = scalar_select 0, %s6, %s4
  $region1: #{yolo_forward.7} parent=0
    #allocation2 [shape = 'u8[32768]{0}', space=vmem, size = 0x8000, scoped, tag = 'input window, operand 1']
    loop: start=0, step=1, limit=4
    $region2: #{yolo_forward.7} parent=1 // loop_pre_header
      _
    $region3: #{yolo_forward.7} parent=1 // loop_header
      %s9 = sphi 0, %s13
      %p10 = scmp.ge.s32.totalorder %s9, 4
      %s17 = sphi 0, %s17
      %s19 = sphi 0, %s17
      %s20 = sphi 0, %s19
      %s34 = sphi 0, %s20
      %s40 = sphi 0, %s42
      %s43 = sphi 0, %s40
      %s44 = sphi 0, %s43
      %s60 = sphi 0, %s44
      %s64 = sphi 0, %s64
      %s66 = sphi 0, %s64
      %s67 = sphi 0, %s66
      %s81 = sphi 0, %s67
      %s87 = sphi 0, %s89
      %s90 = sphi 0, %s87
      %s91 = sphi 0, %s90
      %s107 = sphi 0, %s91
    $region4: #{yolo_forward.7} parent=1 // loop_header_branch
      %12 = sbr.rel (%p10) target = $region8
    $region5: #{yolo_forward.7} parent=1 // loop_body
      %s14 = ssub.s32 %s9, 1
      %s15 = ssub.s32 %s9, 2
      %s16 = sadd.s32 %s9, 1
      %s18 = sadd.s32 %s17, 1
      %p21 = scmp.eq.s32.totalorder %s9, 1
      %p22 = scmp.ne.s32.totalorder %s17, %s19
      %p23 = scmp.eq.s32.totalorder %s9, 0
      %p24 = por %p22, %p23
      %p25 = scmp.ne.s32.totalorder %s17, %s19
      %p26 = scmp.eq.s32.totalorder %s14, 1
      %p27 = por %p25, %p26
      %p28 = scmp.ne.s32.totalorder %s19, %s20
      %p29 = scmp.eq.s32.totalorder %s14, 0
      %p30 = por %p28, %p29
      %p31 = scmp.ne.s32.totalorder %s19, %s20
      %p32 = scmp.eq.s32.totalorder %s15, 1
      %p33 = por %p31, %p32
      %p35 = scmp.ne.s32.totalorder %s20, %s34
      %p36 = scmp.eq.s32.totalorder %s15, 0
      %p37 = por %p35, %p36
      %s38 = ssub.s32 %s9, %s16
      %p39 = scmp.eq.s32.totalorder %s38, 0
      %s41 = sadd.s32 %s40, 1
      %s42 = scalar_select %p39, %s40, %s41
      %p45 = pneg %p39
      %p46 = scmp.eq.s32.totalorder %s9, 1
      %p47 = por %p45, %p46
      %p48 = scmp.ne.s32.totalorder %s40, %s43
      %p49 = scmp.eq.s32.totalorder %s9, 0
      %p50 = por %p48, %p49
      %p51 = scmp.ne.s32.totalorder %s40, %s43
      %p52 = scmp.eq.s32.totalorder %s14, 1
      %p53 = por %p51, %p52
      %p54 = scmp.ne.s32.totalorder %s43, %s44
      %p55 = scmp.eq.s32.totalorder %s14, 0
      %p56 = por %p54, %p55
      %p57 = scmp.ne.s32.totalorder %s43, %s44
      %p58 = scmp.eq.s32.totalorder %s15, 1
      %p59 = por %p57, %p58
      %p61 = scmp.ne.s32.totalorder %s44, %s60
      %p62 = scmp.eq.s32.totalorder %s15, 0
      %p63 = por %p61, %p62
      %s65 = sadd.s32 %s64, 1
      %p68 = scmp.eq.s32.totalorder %s9, 1
      %p69 = scmp.ne.s32.totalorder %s64, %s66
      %p70 = scmp.eq.s32.totalorder %s9, 0
      %p71 = por %p69, %p70
      %p72 = scmp.ne.s32.totalorder %s64, %s66
      %p73 = scmp.eq.s32.totalorder %s14, 1
      %p74 = por %p72, %p73
      %p75 = scmp.ne.s32.totalorder %s66, %s67
      %p76 = scmp.eq.s32.totalorder %s14, 0
      %p77 = por %p75, %p76
      %p78 = scmp.ne.s32.totalorder %s66, %s67
      %p79 = scmp.eq.s32.totalorder %s15, 1
      %p80 = por %p78, %p79
      %p82 = scmp.ne.s32.totalorder %s67, %s81
      %p83 = scmp.eq.s32.totalorder %s15, 0
      %p84 = por %p82, %p83
      %s85 = ssub.s32 %s9, %s16
      %p86 = scmp.eq.s32.totalorder %s85, 0
      %s88 = sadd.s32 %s87, 1
      %s89 = scalar_select %p86, %s87, %s88
      %p92 = pneg %p86
      %p93 = scmp.eq.s32.totalorder %s9, 1
      %p94 = por %p92, %p93
      %p95 = scmp.ne.s32.totalorder %s87, %s90
      %p96 = scmp.eq.s32.totalorder %s9, 0
      %p97 = por %p95, %p96
      %p98 = scmp.ne.s32.totalorder %s87, %s90
      %p99 = scmp.eq.s32.totalorder %s14, 1
      %p100 = por %p98, %p99
      %p101 = scmp.ne.s32.totalorder %s90, %s91
      %p102 = scmp.eq.s32.totalorder %s14, 0
      %p103 = por %p101, %p102
      %p104 = scmp.ne.s32.totalorder %s90, %s91
      %p105 = scmp.eq.s32.totalorder %s15, 1
      %p106 = por %p104, %p105
      %p108 = scmp.ne.s32.totalorder %s91, %s107
      %p109 = scmp.eq.s32.totalorder %s15, 0
      %p110 = por %p108, %p109
      %p111 = scmp.le.s32.totalorder 1, %s9
      %p112 = scmp.lt.s32.totalorder %s9, 3
      %p113 = pnand %p111, %p112
      %p114 = pneg %p113
      // Predicated region
      $region9: #{yolo_forward.7} parent=5 // pred_check
        _
      $region10: #{yolo_forward.7} parent=5 // pred_check_branch
        %116 = sbr.rel (%p113) target = $region12
      $region11: #{yolo_forward.7} parent=5 // pred_region
        %s117 = ssub.s32 %s9, 1
        // Predicated region
        $region13: #{yolo_forward.7} parent=11 // pred_check
          %p118 = pneg %p30
        $region14: #{yolo_forward.7} parent=11 // pred_check_branch
          %120 = sbr.rel (%p118) target = $region16
        $region15: #{yolo_forward.7} parent=11 // pred_region
          _
        $region16: #{yolo_forward.7} parent=11 // pred_fallthru
          _
        // Predicated region
        $region17: #{yolo_forward.7} parent=11 // pred_check
          %p121 = pneg %p77
        $region18: #{yolo_forward.7} parent=11 // pred_check_branch
          %123 = sbr.rel (%p121) target = $region20
        $region19: #{yolo_forward.7} parent=11 // pred_region
          _
        $region20: #{yolo_forward.7} parent=11 // pred_fallthru
          _
      $region12: #{yolo_forward.7} parent=5 // pred_fallthru
        _
      %p124 = scmp.lt.s32.totalorder %s9, 2
      // Predicated region
      $region21: #{yolo_forward.7} parent=5 // pred_check
        %p125 = pneg %p124
      $region22: #{yolo_forward.7} parent=5 // pred_check_branch
        %127 = sbr.rel (%p125) target = $region24
      $region23: #{yolo_forward.7} parent=5 // pred_region
        // Predicated region
        $region25: #{yolo_forward.7} parent=23 // pred_check
          %p128 = pneg %p50
        $region26: #{yolo_forward.7} parent=23 // pred_check_branch
          %130 = sbr.rel (%p128) target = $region28
        $region27: #{yolo_forward.7} parent=23 // pred_region
          %s131 = sand.u32 %s40, 1
          %s132 = sand.u32 %s40, 1
          %s133 = smul.addr %s132, 32
          %s134 = scalar_lea.vmem [#allocation2], %s133
          %s135 = smul.u32 2, %s9
          %s136 = smul.addr %s135, 4
          %s137 = scalar_lea.vmem %s1, %s136
          // Predicated region
          $region29: #{yolo_forward.7} parent=27 // pred_check
            _
          $region30: #{yolo_forward.7} parent=27 // pred_check_branch
            %139 = sbr.rel (0) target = $region32
          $region31: #{yolo_forward.7} parent=27 // pred_region
            // Predicated region
            $region33: #{yolo_forward.7} parent=31 // pred_check
              _
            $region34: #{yolo_forward.7} parent=31 // pred_check_branch
              %141 = sbr.rel (0) target = $region36
            $region35: #{yolo_forward.7} parent=31 // pred_region
              // Predicated region
              $region48: #{yolo_forward.7} parent=35 // pred_check
                _
              $region49: #{yolo_forward.7} parent=35 // pred_check_branch
                %162 = sbr.rel (0) target = $region51
              $region50: #{yolo_forward.7} parent=35 // pred_region
                loop: start=0, step=1, limit=1
                $region52: #{yolo_forward.7} parent=50 // loop_pre_header
                  _
                $region53: #{yolo_forward.7} parent=50 // loop_header
                  %s164 = sphi 0, %s168
                  %p165 = scmp.ge.s32.totalorder %s164, 1
                  %s169 = sphi %s137, %s137
                  %s170 = sphi %s134, %s134
                $region54: #{yolo_forward.7} parent=50 // loop_header_branch
                  %167 = sbr.rel (%p165) target = $region58
                $region55: #{yolo_forward.7} parent=50 // loop_body
                  %v171 = vld [vmem:[%s169] sm:$0xff]
                  %172 = vst [vmem:[%s170] sm:$0xff] %v171
                  %v173 = vld [vmem:[%s169 + $0x10] sm:$0xff]
                  %174 = vst [vmem:[%s170 + $0x8] sm:$0xff] %v173
                  %v175 = vld [vmem:[%s169 + $0x20] sm:$0xff]
                  %176 = vst [vmem:[%s170 + $0x10] sm:$0xff] %v175
                  %v177 = vld [vmem:[%s169 + $0x30] sm:$0xff]
                  %178 = vst [vmem:[%s170 + $0x18] sm:$0xff] %v177
                $region56: #{yolo_forward.7} parent=50 // loop_footer
                  %s168 = sadd.s32 1, %s164
                $region57: #{yolo_forward.7} parent=50 // loop_footer_branch
                  %163 = sbr.rel target = $region53
                $region58: #{yolo_forward.7} parent=50 // loop_exit
                  _
              $region51: #{yolo_forward.7} parent=35 // pred_fallthru
                _
              // Predicated region
              $region59: #{yolo_forward.7} parent=35 // pred_check
                _
              $region60: #{yolo_forward.7} parent=35 // pred_check_branch
                %180 = sbr.rel target = $region62
              $region61: #{yolo_forward.7} parent=35 // pred_region
                _
              $region62: #{yolo_forward.7} parent=35 // pred_fallthru
                _
            $region36: #{yolo_forward.7} parent=31 // pred_fallthru
              _
            // Predicated region
            $region37: #{yolo_forward.7} parent=31 // pred_check
              _
            $region38: #{yolo_forward.7} parent=31 // pred_check_branch
              %143 = sbr.rel target = $region40
            $region39: #{yolo_forward.7} parent=31 // pred_region
              loop: start=0, step=1, limit=1
              $region41: #{yolo_forward.7} parent=39 // loop_pre_header
                _
              $region42: #{yolo_forward.7} parent=39 // loop_header
                %s146 = sphi 0, %s150
                %p147 = scmp.ge.s32.totalorder %s146, 1
                %s151 = sphi %s137, %s137
                %s152 = sphi %s134, %s134
              $region43: #{yolo_forward.7} parent=39 // loop_header_branch
                %149 = sbr.rel (%p147) target = $region47
              $region44: #{yolo_forward.7} parent=39 // loop_body
                %v153 = vld [vmem:[%s151] sm:$0xff]
                %154 = vst [vmem:[%s152] sm:$0xff] %v153
                %v155 = vld [vmem:[%s151 + $0x10] sm:$0xff]
                %156 = vst [vmem:[%s152 + $0x8] sm:$0xff] %v155
                %v157 = vld [vmem:[%s151 + $0x20] sm:$0xff]
                %158 = vst [vmem:[%s152 + $0x10] sm:$0xff] %v157
                %v159 = vld [vmem:[%s151 + $0x30] sm:$0xff]
                %160 = vst [vmem:[%s152 + $0x18] sm:$0xff] %v159
              $region45: #{yolo_forward.7} parent=39 // loop_footer
                %s150 = sadd.s32 1, %s146
              $region46: #{yolo_forward.7} parent=39 // loop_footer_branch
                %145 = sbr.rel target = $region42
              $region47: #{yolo_forward.7} parent=39 // loop_exit
                _
            $region40: #{yolo_forward.7} parent=31 // pred_fallthru
              _
          $region32: #{yolo_forward.7} parent=27 // pred_fallthru
            _
          %181 = vnop
        $region28: #{yolo_forward.7} parent=23 // pred_fallthru
          _
      $region24: #{yolo_forward.7} parent=5 // pred_fallthru
        _
      %p182 = scmp.le.s32.totalorder 1, %s9
      %p183 = scmp.lt.s32.totalorder %s9, 3
      %p184 = pnand %p182, %p183
      %p185 = pneg %p184
      // Predicated region
      $region63: #{yolo_forward.7} parent=5 // pred_check
        _
      $region64: #{yolo_forward.7} parent=5 // pred_check_branch
        %187 = sbr.rel (%p184) target = $region66
      $region65: #{yolo_forward.7} parent=5 // pred_region
        %s188 = ssub.s32 %s9, 1
        %s189 = sand.u32 %s43, 1
        %s190 = sand.u32 %s43, 1
        %s191 = smul.addr %s190, 32
        %s192 = scalar_lea.vmem [#allocation2], %s191
        // Predicated region
        $region67: #{yolo_forward.7} parent=65 // pred_check
          %p193 = pneg %p56
        $region68: #{yolo_forward.7} parent=65 // pred_check_branch
          %195 = sbr.rel (%p193) target = $region70
        $region69: #{yolo_forward.7} parent=65 // pred_region
          _
        $region70: #{yolo_forward.7} parent=65 // pred_fallthru
          _
        %p196 = pneg %p30
        %p197 = pneg %p27
        %s198 = sand.u32 %s43, 1
        %s199 = sand.u32 %s43, 1
        %s200 = smul.addr %s199, 32
        %s201 = scalar_lea.vmem [#allocation2], %s200
        %p202 = pneg %p56
        %p203 = pneg %p53
        %p204 = pneg %p77
        %p205 = pneg %p74
        %p206 = pneg %p103
        %p207 = pneg %p100
        %s208 = smul.u32 2, %s14
        %p209 = scmp.lt.s32.totalorder %s208, 3
        %s210 = scalar_select %p209, %s208, 3
        %s211 = smul.addr %s210, 8
        %s212 = scalar_lea.vmem %s3, %s211
        %s213 = smul.u32 2, %s14
        %s214 = smul.u32 2, %s14
        %p215 = scmp.lt.s32.totalorder %s214, 3
        %s216 = scalar_select %p215, %s214, 3
        %s217 = smul.addr %s216, 8
        %s218 = scalar_lea.vmem %s3, %s217
        %s219 = smul.u32 2, %s14
        %v221 = vld [vmem:[%s0] sm:$0xf]
        %v222 = vld [vmem:[%s192] sm:$0xff]
        %v223 = vld [vmem:[%s192 + $0x8] sm:$0xff]
        %v224 = vld [vmem:[%s192 + $0x10] sm:$0xff]
        %v225 = vld [vmem:[%s192 + $0x18] sm:$0x33]
        %v226 = vld [vmem:[%s2] sm:$0xff]
        %228 = vset.pattern.permute.xlu0 0
        %229 = vperm.xlu0 %228, %v226
        %v230 = vpop.permute.xlu0 %229
        %v236 = vunpack.c.l.b16 %v222
        %v237 = vunpack.c.h.b16 %v222
        %v238 = vunpack.c.l.b16 %v223
        %v239 = vunpack.c.h.b16 %v223
        %v240 = vunpack.c.l.b16 %v224
        %v241 = vunpack.c.h.b16 %v224
        %v242 = vunpack.c.l.b16 %v225
        %v243 = vunpack.c.h.b16 %v225
        %v244 = vpack.c.b16 %v238, %v236
        %v245 = vpack.c.b16 %v239, %v237
        %v246 = vpack.c.b16 %v242, %v240
        %v247 = vpack.c.b16 %v243, %v241
        %vm250 = vcmask 220160
        %v252 = vsel %vm250, %v221, 0
        %vm254 = vcmask 1044480
        %vm255 = vcmask 1045504
        %v256 = vsel %vm254, 4294967295, 65535
        %v257 = vsel %vm255, %v256, 0
        %v259 = vand.u32 %v246, %v257
        %v262 = vand.u32 %v247, %v257
        %264 = vmatprep.subr.bf16.mxu0 %v245
        %265 = vmatpush1.bf16.msra.mxu0 %v244
        %266 = vmatprep.subr.bf16.mxu0 %v262
        %267 = vmatpush1.bf16.msra.mxu0 %v259
        %268 = vmatprep.subr.bf16.mxu0 0
        %269 = vmatpush1.bf16.msra.mxu0 0
        %270 = vmatprep.subr.bf16.mxu0 0
        %271 = vmatpush1.bf16.msra.mxu0 0
        %272 = vmatprep.subr.bf16.mxu0 0
        %273 = vmatpush1.bf16.msra.mxu0 0
        %274 = vmatprep.subr.bf16.mxu0 0
        %275 = vmatpush1.bf16.msra.mxu0 0
        %276 = vmatprep.subr.bf16.mxu0 0
        %277 = vmatpush1.bf16.msra.mxu0 0
        %278 = vmatprep.subr.bf16.mxu0 0
        %279 = vmatpush1.bf16.msra.mxu0 0
        %280 = vmatprep.subr.bf16.mxu0 0
        %281 = vmatpush1.bf16.msra.mxu0 0
        %282 = vmatprep.subr.bf16.mxu0 0
        %283 = vmatpush1.bf16.msra.mxu0 0
        %284 = vmatprep.subr.bf16.mxu0 0
        %285 = vmatpush1.bf16.msra.mxu0 0
        %286 = vmatprep.subr.bf16.mxu0 0
        %287 = vmatpush1.bf16.msra.mxu0 0
        %288 = vmatprep.subr.bf16.mxu0 0
        %289 = vmatpush1.bf16.msra.mxu0 0
        %290 = vmatprep.subr.bf16.mxu0 0
        %291 = vmatpush1.bf16.msra.mxu0 0
        %292 = vmatprep.subr.bf16.mxu0 0
        %293 = vmatpush1.bf16.msra.mxu0 0
        %294 = vmatprep.subr.bf16.mxu0 0
        %295 = vmatpush1.bf16.msra.mxu0 0
        %296 = vmatprep.mubr.bf16.mxu0 0
        %297 = vmatmul.mubr.bf16.gmra.mrb[0].mxu0 %v252
        %v298 = vpop.f32.mrb[0].mxu0
        %v299 = vadd.f32 %v230, %v298
        %v300 = vpop.f32.mrb[0].mxu0
        %v301 = vadd.f32 %v230, %v300
        %v302 = vpop.f32.mrb[0].mxu0
        %v303 = vpop.f32.mrb[0].mxu0
        %304 = vdwg.mxu0
        %vm305 = vcmp.gt.f32.partialorder %v299, 0.0
        %vm306 = vcmp.gt.f32.partialorder %v301, 0.0
        %v307 = vmul.f32 %v299, 0.1
        %v308 = vmul.f32 %v301, 0.1
        %v309 = vsel %vm305, %v299, %v307
        %v310 = vsel %vm306, %v301, %v308
        %311 = vst [vmem:[%s218] sm:$0xff] %v309
        %312 = vst [vmem:[%s218 + $0x8] sm:$0xff] %v310
        %s313 = smul.u32 2, %s14
        %p314 = scmp.lt.s32.totalorder %s313, 3
        %s315 = scalar_select %p314, %s313, 3
        %s316 = smul.addr %s315, 8
        %s317 = scalar_lea.vmem %s3, %s316
        // Predicated region
        $region71: #{yolo_forward.7} parent=65 // pred_check
          %p318 = pneg %p100
        $region72: #{yolo_forward.7} parent=65 // pred_check_branch
          %320 = sbr.rel (%p318) target = $region74
        $region73: #{yolo_forward.7} parent=65 // pred_region
          %s321 = smul.u32 2, %s14
        $region74: #{yolo_forward.7} parent=65 // pred_fallthru
          _
      $region66: #{yolo_forward.7} parent=5 // pred_fallthru
        _
      %p322 = scmp.le.s32.totalorder 2, %s9
      // Predicated region
      $region75: #{yolo_forward.7} parent=5 // pred_check
        %p323 = pneg %p322
      $region76: #{yolo_forward.7} parent=5 // pred_check_branch
        %325 = sbr.rel (%p323) target = $region78
      $region77: #{yolo_forward.7} parent=5 // pred_region
        %s326 = ssub.s32 %s9, 2
        // Predicated region
        $region79: #{yolo_forward.7} parent=77 // pred_check
          %p327 = pneg %p106
        $region80: #{yolo_forward.7} parent=77 // pred_check_branch
          %329 = sbr.rel (%p327) target = $region82
        $region81: #{yolo_forward.7} parent=77 // pred_region
          %s330 = smul.u32 2, %s15
          %p331 = scmp.lt.s32.totalorder %s330, 3
          %s332 = scalar_select %p331, %s330, 3
          %s333 = smul.addr %s332, 8
          %s334 = scalar_lea.vmem %s3, %s333
        $region82: #{yolo_forward.7} parent=77 // pred_fallthru
          _
      $region78: #{yolo_forward.7} parent=5 // pred_fallthru
        _
    $region6: #{yolo_forward.7} parent=1 // loop_footer
      %s13 = sadd.s32 1, %s9
    $region7: #{yolo_forward.7} parent=1 // loop_footer_branch
      %8 = sbr.rel target = $region3
    $region8: #{yolo_forward.7} parent=1 // loop_exit
      _

// kernel: yolo_forward.8
$region0: #{yolo_forward.8}
  #allocation0 [shape = 'u32[]', space=smem, size = 0x4, offset = 0x4, fixed_abs, tag = 'smem constant byte address 0x4 - core index']
  #allocation1 [shape = 'u32[144,128]{1,0:T(1,128)}', space=vmem, size = 0x12000, scoped, tag = 'internal scratch']
  %s0 = inlined_call_operand.vmem [shape: bf16[16,72], index: 0, kind: input, shape index: {}]
  %s1 = inlined_call_operand.vmem [shape: bf16[72,128], index: 1, kind: input, shape index: {}]
  %s2 = inlined_call_operand.vmem [shape: f32[16,1], index: 2, kind: input, shape index: {}]
  %s3 = inlined_call_operand.vmem [shape: f32[16,128], index: 3, kind: output, shape index: {}]
  %s4 = sld [smem:[#allocation0]]
  $region22: #{yolo_forward.8} parent=0
    _
  %s6 = ssub.s32 1, %s4
  %s7 = scalar_select 0, %s6, %s4
  // Predicated region
  $region2: #{yolo_forward.8} parent=0 // pred_check
    _
  $region3: #{yolo_forward.8} parent=0 // pred_check_branch
    %9 = sbr.rel (0) target = $region5
  $region4: #{yolo_forward.8} parent=0 // pred_region
    _
  $region5: #{yolo_forward.8} parent=0 // pred_fallthru
    _
  // Predicated region
  $region6: #{yolo_forward.8} parent=0 // pred_check
    _
  $region7: #{yolo_forward.8} parent=0 // pred_check_branch
    %11 = sbr.rel (0) target = $region9
  $region8: #{yolo_forward.8} parent=0 // pred_region
    _
  $region9: #{yolo_forward.8} parent=0 // pred_fallthru
    _
  // Predicated region
  $region10: #{yolo_forward.8} parent=0 // pred_check
    _
  $region11: #{yolo_forward.8} parent=0 // pred_check_branch
    %13 = sbr.rel (0) target = $region13
  $region12: #{yolo_forward.8} parent=0 // pred_region
    _
  $region13: #{yolo_forward.8} parent=0 // pred_fallthru
    _
  %v15 = vld [vmem:[%s0] sm:$0xf]
  %v16 = vld [vmem:[%s0 + $0x4] sm:$0xf]
  %v17 = vld [vmem:[%s1] sm:$0xf]
  %v18 = vld [vmem:[%s1 + $0x4] sm:$0xf]
  %v19 = vld [vmem:[%s1 + $0x8] sm:$0xf]
  %v20 = vld [vmem:[%s1 + $0xc] sm:$0xf]
  %v21 = vld [vmem:[%s1 + $0x10] sm:$0xf]
  %v22 = vld [vmem:[%s1 + $0x14] sm:$0xf]
  %v23 = vld [vmem:[%s1 + $0x18] sm:$0xf]
  %v24 = vld [vmem:[%s1 + $0x1c] sm:$0xf]
  %v25 = vld [vmem:[%s1 + $0x20] sm:$0xf]
  %v26 = vld [vmem:[%s2] sm:$0xff]
  %v27 = vld [vmem:[%s2 + $0x8] sm:$0xff]
  %29 = vset.pattern.permute.xlu0 0
  %30 = vperm.xlu0 %29, %v26
  %v31 = vpop.permute.xlu0 %30
  %34 = vset.pattern.permute.xlu0 0
  %35 = vperm.xlu0 %34, %v27
  %v36 = vpop.permute.xlu0 %35
  %v40 = vunpack.c.l.b16 %v15
  %v41 = vunpack.c.l.b16 %v16
  %v42 = vpack.c.b16 %v41, %v40
  %v52 = vunpack.c.l.b16 %v17
  %v53 = vunpack.c.l.b16 %v18
  %v54 = vunpack.c.l.b16 %v19
  %v55 = vunpack.c.l.b16 %v20
  %v56 = vunpack.c.l.b16 %v21
  %v57 = vunpack.c.l.b16 %v22
  %v58 = vunpack.c.l.b16 %v23
  %v59 = vunpack.c.l.b16 %v24
  %v60 = vunpack.c.l.b16 %v25
  %v61 = vpack.c.b16 %v53, %v52
  %v62 = vpack.c.b16 %v55, %v54
  %v63 = vpack.c.b16 %v57, %v56
  %v64 = vpack.c.b16 %v59, %v58
  %v65 = vpack.c.b16 %v60, %v60
  %vm70 = vcmask 588800
  %v72 = vsel %vm70, %v42, 0
  %vm74 = vcmask 1043456
  %v76 = vsel %vm74, %v65, 0
  %78 = vmatprep.subr.bf16.mxu0 0
  %79 = vmatpush1.bf16.msra.mxu0 %v61
  %80 = vmatprep.subr.bf16.mxu0 0
  %81 = vmatpush1.bf16.msra.mxu0 %v62
  %82 = vmatprep.subr.bf16.mxu0 0
  %83 = vmatpush1.bf16.msra.mxu0 %v63
  %84 = vmatprep.subr.bf16.mxu0 0
  %85 = vmatpush1.bf16.msra.mxu0 %v64
  %86 = vmatprep.subr.bf16.mxu0 0
  %87 = vmatpush1.bf16.msra.mxu0 %v76
  %88 = vmatprep.subr.bf16.mxu0 0
  %89 = vmatpush1.bf16.msra.mxu0 0
  %90 = vmatprep.subr.bf16.mxu0 0
  %91 = vmatpush1.bf16.msra.mxu0 0
  %92 = vmatprep.subr.bf16.mxu0 0
  %93 = vmatpush1.bf16.msra.mxu0 0
  %94 = vmatprep.subr.bf16.mxu0 0
  %95 = vmatpush1.bf16.msra.mxu0 0
  %96 = vmatprep.subr.bf16.mxu0 0
  %97 = vmatpush1.bf16.msra.mxu0 0
  %98 = vmatprep.subr.bf16.mxu0 0
  %99 = vmatpush1.bf16.msra.mxu0 0
  %100 = vmatprep.subr.bf16.mxu0 0
  %101 = vmatpush1.bf16.msra.mxu0 0
  %102 = vmatprep.subr.bf16.mxu0 0
  %103 = vmatpush1.bf16.msra.mxu0 0
  %104 = vmatprep.subr.bf16.mxu0 0
  %105 = vmatpush1.bf16.msra.mxu0 0
  %106 = vmatprep.subr.bf16.mxu0 0
  %107 = vmatpush1.bf16.msra.mxu0 0
  %108 = vmatprep.subr.bf16.mxu0 0
  %109 = vmatpush1.bf16.msra.mxu0 0
  %110 = vmatprep.mubr.bf16.mxu0 0
  %111 = vmatmul.mubr.bf16.gmra.mrb[0].mxu0 %v72
  %v112 = vpop.f32.mrb[0].mxu0
  %v113 = vadd.f32 %v31, %v112
  %v114 = vpop.f32.mrb[0].mxu0
  %v115 = vpop.f32.mrb[0].mxu0
  %v116 = vadd.f32 %v36, %v115
  %v117 = vpop.f32.mrb[0].mxu0
  %118 = vdwg.mxu0
  %vm119 = vcmp.gt.f32.partialorder %v113, 0.0
  %vm120 = vcmp.gt.f32.partialorder %v116, 0.0
  %v121 = vmul.f32 %v113, 0.1
  %v122 = vmul.f32 %v116, 0.1
  %v123 = vsel %vm119, %v113, %v121
  %v124 = vsel %vm120, %v116, %v122
  %125 = vst [vmem:[%s3] sm:$0xff] %v123
  %126 = vst [vmem:[%s3 + $0x8] sm:$0xff] %v124
  // Predicated region
  $region14: #{yolo_forward.8} parent=0 // pred_check
    _
  $region15: #{yolo_forward.8} parent=0 // pred_check_branch
    %128 = sbr.rel (0) target = $region17
  $region16: #{yolo_forward.8} parent=0 // pred_region
    _
  $region17: #{yolo_forward.8} parent=0 // pred_fallthru
    _
  // Predicated region
  $region18: #{yolo_forward.8} parent=0 // pred_check
    _
  $region19: #{yolo_forward.8} parent=0 // pred_check_branch
    %130 = sbr.rel (0) target = $region21
  $region20: #{yolo_forward.8} parent=0 // pred_region
    _
  $region21: #{yolo_forward.8} parent=0 // pred_fallthru
    _

// kernel: yolo_forward.9
$region0: #{yolo_forward.9}
  #allocation0 [shape = 'u32[]', space=smem, size = 0x4, offset = 0x4, fixed_abs, tag = 'smem constant byte address 0x4 - core index']
  #allocation1 [shape = 'u32[144,128]{1,0:T(1,128)}', space=vmem, size = 0x12000, scoped, tag = 'internal scratch']
  %s0 = inlined_call_operand.vmem [shape: bf16[16,144], index: 0, kind: input, shape index: {}]
  %s1 = inlined_call_operand.vmem [shape: bf16[144,128], index: 1, kind: input, shape index: {}]
  %s2 = inlined_call_operand.vmem [shape: f32[16,1], index: 2, kind: input, shape index: {}]
  %s3 = inlined_call_operand.vmem [shape: f32[16,128], index: 3, kind: output, shape index: {}]
  %s4 = sld [smem:[#allocation0]]
  $region22: #{yolo_forward.9} parent=0
    _
  %s6 = ssub.s32 1, %s4
  %s7 = scalar_select 0, %s6, %s4
  // Predicated region
  $region2: #{yolo_forward.9} parent=0 // pred_check
    _
  $region3: #{yolo_forward.9} parent=0 // pred_check_branch
    %9 = sbr.rel (0) target = $region5
  $region4: #{yolo_forward.9} parent=0 // pred_region
    _
  $region5: #{yolo_forward.9} parent=0 // pred_fallthru
    _
  // Predicated region
  $region6: #{yolo_forward.9} parent=0 // pred_check
    _
  $region7: #{yolo_forward.9} parent=0 // pred_check_branch
    %11 = sbr.rel (0) target = $region9
  $region8: #{yolo_forward.9} parent=0 // pred_region
    _
  $region9: #{yolo_forward.9} parent=0 // pred_fallthru
    _
  // Predicated region
  $region10: #{yolo_forward.9} parent=0 // pred_check
    _
  $region11: #{yolo_forward.9} parent=0 // pred_check_branch
    %13 = sbr.rel (0) target = $region13
  $region12: #{yolo_forward.9} parent=0 // pred_region
    _
  $region13: #{yolo_forward.9} parent=0 // pred_fallthru
    _
  %v15 = vld [vmem:[%s0] sm:$0xff]
  %v16 = vld [vmem:[%s0 + $0x8] sm:$0xff]
  %v17 = vld [vmem:[%s1] sm:$0xf]
  %v18 = vld [vmem:[%s1 + $0x4] sm:$0xf]
  %v19 = vld [vmem:[%s1 + $0x8] sm:$0xf]
  %v20 = vld [vmem:[%s1 + $0xc] sm:$0xf]
  %v21 = vld [vmem:[%s1 + $0x10] sm:$0xf]
  %v22 = vld [vmem:[%s1 + $0x14] sm:$0xf]
  %v23 = vld [vmem:[%s1 + $0x18] sm:$0xf]
  %v24 = vld [vmem:[%s1 + $0x1c] sm:$0xf]
  %v25 = vld [vmem:[%s1 + $0x20] sm:$0xf]
  %v26 = vld [vmem:[%s1 + $0x24] sm:$0xf]
  %v27 = vld [vmem:[%s1 + $0x28] sm:$0xf]
  %v28 = vld [vmem:[%s1 + $0x2c] sm:$0xf]
  %v29 = vld [vmem:[%s1 + $0x30] sm:$0xf]
  %v30 = vld [vmem:[%s1 + $0x34] sm:$0xf]
  %v31 = vld [vmem:[%s1 + $0x38] sm:$0xf]
  %v32 = vld [vmem:[%s1 + $0x3c] sm:$0xf]
  %v33 = vld [vmem:[%s1 + $0x40] sm:$0xf]
  %v34 = vld [vmem:[%s1 + $0x44] sm:$0xf]
  %v35 = vld [vmem:[%s2] sm:$0xff]
  %v36 = vld [vmem:[%s2 + $0x8] sm:$0xff]
  %38 = vset.pattern.permute.xlu0 0
  %39 = vperm.xlu0 %38, %v35
  %v40 = vpop.permute.xlu0 %39
  %43 = vset.pattern.permute.xlu0 0
  %44 = vperm.xlu0 %43, %v36
  %v45 = vpop.permute.xlu0 %44
  %v49 = vunpack.c.l.b16 %v15
  %v50 = vunpack.c.h.b16 %v15
  %v51 = vunpack.c.l.b16 %v16
  %v52 = vunpack.c.h.b16 %v16
  %v53 = vpack.c.b16 %v51, %v49
  %v54 = vpack.c.b16 %v52, %v50
  %v74 = vunpack.c.l.b16 %v17
  %v75 = vunpack.c.l.b16 %v18
  %v76 = vunpack.c.l.b16 %v19
  %v77 = vunpack.c.l.b16 %v20
  %v78 = vunpack.c.l.b16 %v21
  %v79 = vunpack.c.l.b16 %v22
  %v80 = vunpack.c.l.b16 %v23
  %v81 = vunpack.c.l.b16 %v24
  %v82 = vunpack.c.l.b16 %v25
  %v83 = vunpack.c.l.b16 %v26
  %v84 = vunpack.c.l.b16 %v27
  %v85 = vunpack.c.l.b16 %v28
  %v86 = vunpack.c.l.b16 %v29
  %v87 = vunpack.c.l.b16 %v30
  %v88 = vunpack.c.l.b16 %v31
  %v89 = vunpack.c.l.b16 %v32
  %v90 = vunpack.c.l.b16 %v33
  %v91 = vunpack.c.l.b16 %v34
  %v92 = vpack.c.b16 %v75, %v74
  %v93 = vpack.c.b16 %v77, %v76
  %v94 = vpack.c.b16 %v79, %v78
  %v95 = vpack.c.b16 %v81, %v80
  %v96 = vpack.c.b16 %v83, %v82
  %v97 = vpack.c.b16 %v85, %v84
  %v98 = vpack.c.b16 %v87, %v86
  %v99 = vpack.c.b16 %v89, %v88
  %v100 = vpack.c.b16 %v91, %v90
  %vm110 = vcmask 130048
  %v112 = vsel %vm110, %v54, 0
  %114 = vmatprep.subr.bf16.mxu0 0
  %115 = vmatpush1.bf16.msra.mxu0 %v92
  %116 = vmatprep.subr.bf16.mxu0 0
  %117 = vmatpush1.bf16.msra.mxu0 %v93
  %118 = vmatprep.subr.bf16.mxu0 0
  %119 = vmatpush1.bf16.msra.mxu0 %v94
  %120 = vmatprep.subr.bf16.mxu0 0
  %121 = vmatpush1.bf16.msra.mxu0 %v95
  %122 = vmatprep.subr.bf16.mxu0 0
  %123 = vmatpush1.bf16.msra.mxu0 %v96
  %124 = vmatprep.subr.bf16.mxu0 0
  %125 = vmatpush1.bf16.msra.mxu0 %v97
  %126 = vmatprep.subr.bf16.mxu0 0
  %127 = vmatpush1.bf16.msra.mxu0 %v98
  %128 = vmatprep.subr.bf16.mxu0 0
  %129 = vmatpush1.bf16.msra.mxu0 %v99
  %130 = vmatprep.subr.bf16.mxu0 0
  %131 = vmatpush1.bf16.msra.mxu0 %v100
  %132 = vmatprep.subr.bf16.mxu0 0
  %133 = vmatpush1.bf16.msra.mxu0 0
  %134 = vmatprep.subr.bf16.mxu0 0
  %135 = vmatpush1.bf16.msra.mxu0 0
  %136 = vmatprep.subr.bf16.mxu0 0
  %137 = vmatpush1.bf16.msra.mxu0 0
  %138 = vmatprep.subr.bf16.mxu0 0
  %139 = vmatpush1.bf16.msra.mxu0 0
  %140 = vmatprep.subr.bf16.mxu0 0
  %141 = vmatpush1.bf16.msra.mxu0 0
  %142 = vmatprep.subr.bf16.mxu0 0
  %143 = vmatpush1.bf16.msra.mxu0 0
  %144 = vmatprep.subr.bf16.mxu0 0
  %145 = vmatpush1.bf16.msra.mxu0 0
  %146 = vmatprep.mubr.bf16.mxu0 %v112
  %147 = vmatmul.mubr.bf16.gmra.mrb[0].mxu0 %v53
  %v148 = vpop.f32.mrb[0].mxu0
  %v149 = vadd.f32 %v40, %v148
  %v150 = vpop.f32.mrb[0].mxu0
  %v151 = vpop.f32.mrb[0].mxu0
  %v152 = vadd.f32 %v45, %v151
  %v153 = vpop.f32.mrb[0].mxu0
  %154 = vdwg.mxu0
  %vm155 = vcmp.gt.f32.partialorder %v149, 0.0
  %vm156 = vcmp.gt.f32.partialorder %v152, 0.0
  %v157 = vmul.f32 %v149, 0.1
  %v158 = vmul.f32 %v152, 0.1
  %v159 = vsel %vm155, %v149, %v157
  %v160 = vsel %vm156, %v152, %v158
  %161 = vst [vmem:[%s3] sm:$0xff] %v159
  %162 = vst [vmem:[%s3 + $0x8] sm:$0xff] %v160
  // Predicated region
  $region14: #{yolo_forward.9} parent=0 // pred_check
    _
  $region15: #{yolo_forward.9} parent=0 // pred_check_branch
    %164 = sbr.rel (0) target = $region17
  $region16: #{yolo_forward.9} parent=0 // pred_region
    _
  $region17: #{yolo_forward.9} parent=0 // pred_fallthru
    _
  // Predicated region
  $region18: #{yolo_forward.9} parent=0 // pred_check
    _
  $region19: #{yolo_forward.9} parent=0 // pred_check_branch
    %166 = sbr.rel (0) target = $region21
  $region20: #{yolo_forward.9} parent=0 // pred_region
    _
  $region21: #{yolo_forward.9} parent=0 // pred_fallthru
    _

// kernel: yolo_forward.11
$region0: #{yolo_forward.11}
  #allocation0 [shape = 'u32[]', space=smem, size = 0x4, offset = 0x4, fixed_abs, tag = 'smem constant byte address 0x4 - core index']
  #allocation1 [shape = 'u32[144,128]{1,0:T(1,128)}', space=vmem, size = 0x12000, scoped, tag = 'internal scratch']
  %s0 = inlined_call_operand.vmem [shape: bf16[32,144], index: 0, kind: input, shape index: {}]
  %s1 = inlined_call_operand.vmem [shape: bf16[144,128], index: 1, kind: input, shape index: {}]
  %s2 = inlined_call_operand.vmem [shape: f32[32,1], index: 2, kind: input, shape index: {}]
  %s3 = inlined_call_operand.vmem [shape: f32[32,128], index: 3, kind: output, shape index: {}]
  %s4 = sld [smem:[#allocation0]]
  $region22: #{yolo_forward.11} parent=0
    _
  %s6 = ssub.s32 1, %s4
  %s7 = scalar_select 0, %s6, %s4
  // Predicated region
  $region2: #{yolo_forward.11} parent=0 // pred_check
    _
  $region3: #{yolo_forward.11} parent=0 // pred_check_branch
    %9 = sbr.rel (0) target = $region5
  $region4: #{yolo_forward.11} parent=0 // pred_region
    _
  $region5: #{yolo_forward.11} parent=0 // pred_fallthru
    _
  // Predicated region
  $region6: #{yolo_forward.11} parent=0 // pred_check
    _
  $region7: #{yolo_forward.11} parent=0 // pred_check_branch
    %11 = sbr.rel (0) target = $region9
  $region8: #{yolo_forward.11} parent=0 // pred_region
    _
  $region9: #{yolo_forward.11} parent=0 // pred_fallthru
    _
  // Predicated region
  $region10: #{yolo_forward.11} parent=0 // pred_check
    _
  $region11: #{yolo_forward.11} parent=0 // pred_check_branch
    %13 = sbr.rel (0) target = $region13
  $region12: #{yolo_forward.11} parent=0 // pred_region
    _
  $region13: #{yolo_forward.11} parent=0 // pred_fallthru
    _
  %v15 = vld [vmem:[%s0] sm:$0xff]
  %v16 = vld [vmem:[%s0 + $0x8] sm:$0xff]
  %v17 = vld [vmem:[%s0 + $0x10] sm:$0xff]
  %v18 = vld [vmem:[%s0 + $0x18] sm:$0xff]
  %v19 = vld [vmem:[%s1] sm:$0xf]
  %v20 = vld [vmem:[%s1 + $0x4] sm:$0xf]
  %v21 = vld [vmem:[%s1 + $0x8] sm:$0xf]
  %v22 = vld [vmem:[%s1 + $0xc] sm:$0xf]
  %v23 = vld [vmem:[%s1 + $0x10] sm:$0xf]
  %v24 = vld [vmem:[%s1 + $0x14] sm:$0xf]
  %v25 = vld [vmem:[%s1 + $0x18] sm:$0xf]
  %v26 = vld [vmem:[%s1 + $0x1c] sm:$0xf]
  %v27 = vld [vmem:[%s1 + $0x20] sm:$0xf]
  %v28 = vld [vmem:[%s1 + $0x24] sm:$0xf]
  %v29 = vld [vmem:[%s1 + $0x28] sm:$0xf]
  %v30 = vld [vmem:[%s1 + $0x2c] sm:$0xf]
  %v31 = vld [vmem:[%s1 + $0x30] sm:$0xf]
  %v32 = vld [vmem:[%s1 + $0x34] sm:$0xf]
  %v33 = vld [vmem:[%s1 + $0x38] sm:$0xf]
  %v34 = vld [vmem:[%s1 + $0x3c] sm:$0xf]
  %v35 = vld [vmem:[%s1 + $0x40] sm:$0xf]
  %v36 = vld [vmem:[%s1 + $0x44] sm:$0xf]
  %v37 = vld [vmem:[%s2] sm:$0xff]
  %v38 = vld [vmem:[%s2 + $0x8] sm:$0xff]
  %v39 = vld [vmem:[%s2 + $0x10] sm:$0xff]
  %v40 = vld [vmem:[%s2 + $0x18] sm:$0xff]
  %42 = vset.pattern.permute.xlu0 0
  %43 = vperm.xlu0 %42, %v37
  %v44 = vpop.permute.xlu0 %43
  %47 = vset.pattern.permute.xlu0 0
  %48 = vperm.xlu0 %47, %v38
  %v49 = vpop.permute.xlu0 %48
  %52 = vset.pattern.permute.xlu0 0
  %53 = vperm.xlu0 %52, %v39
  %v54 = vpop.permute.xlu0 %53
  %57 = vset.pattern.permute.xlu0 0
  %58 = vperm.xlu0 %57, %v40
  %v59 = vpop.permute.xlu0 %58
  %v65 = vunpack.c.l.b16 %v15
  %v66 = vunpack.c.h.b16 %v15
  %v67 = vunpack.c.l.b16 %v16
  %v68 = vunpack.c.h.b16 %v16
  %v69 = vunpack.c.l.b16 %v17
  %v70 = vunpack.c.h.b16 %v17
  %v71 = vunpack.c.l.b16 %v18
  %v72 = vunpack.c.h.b16 %v18
  %v73 = vpack.c.b16 %v67, %v65
  %v74 = vpack.c.b16 %v68, %v66
  %v75 = vpack.c.b16 %v71, %v69
  %v76 = vpack.c.b16 %v72, %v70
  %v97 = vunpack.c.l.b16 %v19
  %v98 = vunpack.c.l.b16 %v20
  %v99 = vunpack.c.l.b16 %v21
  %v100 = vunpack.c.l.b16 %v22
  %v101 = vunpack.c.l.b16 %v23
  %v102 = vunpack.c.l.b16 %v24
  %v103 = vunpack.c.l.b16 %v25
  %v104 = vunpack.c.l.b16 %v26
  %v105 = vunpack.c.l.b16 %v27
  %v106 = vunpack.c.l.b16 %v28
  %v107 = vunpack.c.l.b16 %v29
  %v108 = vunpack.c.l.b16 %v30
  %v109 = vunpack.c.l.b16 %v31
  %v110 = vunpack.c.l.b16 %v32
  %v111 = vunpack.c.l.b16 %v33
  %v112 = vunpack.c.l.b16 %v34
  %v113 = vunpack.c.l.b16 %v35
  %v114 = vunpack.c.l.b16 %v36
  %v115 = vpack.c.b16 %v98, %v97
  %v116 = vpack.c.b16 %v100, %v99
  %v117 = vpack.c.b16 %v102, %v101
  %v118 = vpack.c.b16 %v104, %v103
  %v119 = vpack.c.b16 %v106, %v105
  %v120 = vpack.c.b16 %v108, %v107
  %v121 = vpack.c.b16 %v110, %v109
  %v122 = vpack.c.b16 %v112, %v111
  %v123 = vpack.c.b16 %v114, %v113
  %vm133 = vcmask 130048
  %v135 = vsel %vm133, %v74, 0
  %v138 = vsel %vm133, %v76, 0
  %140 = vmatprep.subr.bf16.mxu0 0
  %141 = vmatpush1.bf16.msra.mxu0 %v115
  %142 = vmatprep.subr.bf16.mxu0 0
  %143 = vmatpush1.bf16.msra.mxu0 %v116
  %144 = vmatprep.subr.bf16.mxu0 0
  %145 = vmatpush1.bf16.msra.mxu0 %v117
  %146 = vmatprep.subr.bf16.mxu0 0
  %147 = vmatpush1.bf16.msra.mxu0 %v118
  %148 = vmatprep.subr.bf16.mxu0 0
  %149 = vmatpush1.bf16.msra.mxu0 %v119
  %150 = vmatprep.subr.bf16.mxu0 0
  %151 = vmatpush1.bf16.msra.mxu0 %v120
  %152 = vmatprep.subr.bf16.mxu0 0
  %153 = vmatpush1.bf16.msra.mxu0 %v121
  %154 = vmatprep.subr.bf16.mxu0 0
  %155 = vmatpush1.bf16.msra.mxu0 %v122
  %156 = vmatprep.subr.bf16.mxu0 0
  %157 = vmatpush1.bf16.msra.mxu0 %v123
  %158 = vmatprep.subr.bf16.mxu0 0
  %159 = vmatpush1.bf16.msra.mxu0 0
  %160 = vmatprep.subr.bf16.mxu0 0
  %161 = vmatpush1.bf16.msra.mxu0 0
  %162 = vmatprep.subr.bf16.mxu0 0
  %163 = vmatpush1.bf16.msra.mxu0 0
  %164 = vmatprep.subr.bf16.mxu0 0
  %165 = vmatpush1.bf16.msra.mxu0 0
  %166 = vmatprep.subr.bf16.mxu0 0
  %167 = vmatpush1.bf16.msra.mxu0 0
  %168 = vmatprep.subr.bf16.mxu0 0
  %169 = vmatpush1.bf16.msra.mxu0 0
  %170 = vmatprep.subr.bf16.mxu0 0
  %171 = vmatpush1.bf16.msra.mxu0 0
  %172 = vmatprep.mubr.bf16.mxu0 %v135
  %173 = vmatmul.mubr.bf16.gmra.mrb[0].mxu0 %v73
  %v174 = vpop.f32.mrb[0].mxu0
  %v175 = vadd.f32 %v44, %v174
  %v176 = vpop.f32.mrb[0].mxu0
  %v177 = vpop.f32.mrb[0].mxu0
  %v178 = vadd.f32 %v49, %v177
  %v179 = vpop.f32.mrb[0].mxu0
  %180 = vmatprep.mubr.bf16.mxu0 %v138
  %181 = vmatmul.mubr.bf16.gmra.mrb[0].mxu0 %v75
  %v182 = vpop.f32.mrb[0].mxu0
  %v183 = vadd.f32 %v54, %v182
  %v184 = vpop.f32.mrb[0].mxu0
  %v185 = vpop.f32.mrb[0].mxu0
  %v186 = vadd.f32 %v59, %v185
  %v187 = vpop.f32.mrb[0].mxu0
  %188 = vdwg.mxu0
  %vm189 = vcmp.gt.f32.partialorder %v175, 0.0
  %vm190 = vcmp.gt.f32.partialorder %v178, 0.0
  %vm191 = vcmp.gt.f32.partialorder %v183, 0.0
  %vm192 = vcmp.gt.f32.partialorder %v186, 0.0
  %v193 = vmul.f32 %v175, 0.1
  %v194 = vmul.f32 %v178, 0.1
  %v195 = vmul.f32 %v183, 0.1
  %v196 = vmul.f32 %v186, 0.1
  %v197 = vsel %vm189, %v175, %v193
  %v198 = vsel %vm190, %v178, %v194
  %v199 = vsel %vm191, %v183, %v195
  %v200 = vsel %vm192, %v186, %v196
  %201 = vst [vmem:[%s3] sm:$0xff] %v197
  %202 = vst [vmem:[%s3 + $0x8] sm:$0xff] %v198
  %203 = vst [vmem:[%s3 + $0x10] sm:$0xff] %v199
  %204 = vst [vmem:[%s3 + $0x18] sm:$0xff] %v200
  // Predicated region
  $region14: #{yolo_forward.11} parent=0 // pred_check
    _
  $region15: #{yolo_forward.11} parent=0 // pred_check_branch
    %206 = sbr.rel (0) target = $region17
  $region16: #{yolo_forward.11} parent=0 // pred_region
    _
  $region17: #{yolo_forward.11} parent=0 // pred_fallthru
    _
  // Predicated region
  $region18: #{yolo_forward.11} parent=0 // pred_check
    _
  $region19: #{yolo_forward.11} parent=0 // pred_check_branch
    %208 = sbr.rel (0) target = $region21
  $region20: #{yolo_forward.11} parent=0 // pred_region
    _
  $region21: #{yolo_forward.11} parent=0 // pred_fallthru
    _

// kernel: yolo_forward.13
$region0: #{yolo_forward.13}
  #allocation0 [shape = 'u32[]', space=smem, size = 0x4, offset = 0x4, fixed_abs, tag = 'smem constant byte address 0x4 - core index']
  #allocation1 [shape = 'u32[144,128]{1,0:T(1,128)}', space=vmem, size = 0x12000, scoped, tag = 'internal scratch']
  %s0 = inlined_call_operand.vmem [shape: bf16[18,288], index: 0, kind: input, shape index: {}]
  %s1 = inlined_call_operand.vmem [shape: bf16[288,128], index: 1, kind: input, shape index: {}]
  %s2 = inlined_call_operand.vmem [shape: f32[18,1], index: 2, kind: input, shape index: {}]
  %s3 = inlined_call_operand.vmem [shape: f32[18,128], index: 3, kind: output, shape index: {}]
  %s4 = sld [smem:[#allocation0]]
  $region22: #{yolo_forward.13} parent=0
    _
  %s6 = ssub.s32 1, %s4
  %s7 = scalar_select 0, %s6, %s4
  // Predicated region
  $region2: #{yolo_forward.13} parent=0 // pred_check
    _
  $region3: #{yolo_forward.13} parent=0 // pred_check_branch
    %9 = sbr.rel (0) target = $region5
  $region4: #{yolo_forward.13} parent=0 // pred_region
    _
  $region5: #{yolo_forward.13} parent=0 // pred_fallthru
    _
  // Predicated region
  $region6: #{yolo_forward.13} parent=0 // pred_check
    _
  $region7: #{yolo_forward.13} parent=0 // pred_check_branch
    %11 = sbr.rel (0) target = $region9
  $region8: #{yolo_forward.13} parent=0 // pred_region
    _
  $region9: #{yolo_forward.13} parent=0 // pred_fallthru
    _
  // Predicated region
  $region10: #{yolo_forward.13} parent=0 // pred_check
    _
  $region11: #{yolo_forward.13} parent=0 // pred_check_branch
    %13 = sbr.rel (0) target = $region13
  $region12: #{yolo_forward.13} parent=0 // pred_region
    _
  $region13: #{yolo_forward.13} parent=0 // pred_fallthru
    _
  %v15 = vld [vmem:[%s0] sm:$0xff]
  %v16 = vld [vmem:[%s0 + $0x8] sm:$0xf]
  %v17 = vld [vmem:[%s0 + $0xc] sm:$0xff]
  %v18 = vld [vmem:[%s0 + $0x14] sm:$0xf]
  %v19 = vld [vmem:[%s0 + $0x18] sm:$0x11]
  %v20 = vld [vmem:[%s0 + $0x20] sm:$0x1]
  %v21 = vld [vmem:[%s1] sm:$0xf]
  %v22 = vld [vmem:[%s1 + $0x4] sm:$0xf]
  %v23 = vld [vmem:[%s1 + $0x8] sm:$0xf]
  %v24 = vld [vmem:[%s1 + $0xc] sm:$0xf]
  %v25 = vld [vmem:[%s1 + $0x10] sm:$0xf]
  %v26 = vld [vmem:[%s1 + $0x14] sm:$0xf]
  %v27 = vld [vmem:[%s1 + $0x18] sm:$0xf]
  %v28 = vld [vmem:[%s1 + $0x1c] sm:$0xf]
  %v29 = vld [vmem:[%s1 + $0x20] sm:$0xf]
  %v30 = vld [vmem:[%s1 + $0x24] sm:$0xf]
  %v31 = vld [vmem:[%s1 + $0x28] sm:$0xf]
  %v32 = vld [vmem:[%s1 + $0x2c] sm:$0xf]
  %v33 = vld [vmem:[%s1 + $0x30] sm:$0xf]
  %v34 = vld [vmem:[%s1 + $0x34] sm:$0xf]
  %v35 = vld [vmem:[%s1 + $0x38] sm:$0xf]
  %v36 = vld [vmem:[%s1 + $0x3c] sm:$0xf]
  %v37 = vld [vmem:[%s1 + $0x40] sm:$0xf]
  %v38 = vld [vmem:[%s1 + $0x44] sm:$0xf]
  %v39 = vld [vmem:[%s1 + $0x48] sm:$0xf]
  %v40 = vld [vmem:[%s1 + $0x4c] sm:$0xf]
  %v41 = vld [vmem:[%s1 + $0x50] sm:$0xf]
  %v42 = vld [vmem:[%s1 + $0x54] sm:$0xf]
  %v43 = vld [vmem:[%s1 + $0x58] sm:$0xf]
  %v44 = vld [vmem:[%s1 + $0x5c] sm:$0xf]
  %v45 = vld [vmem:[%s1 + $0x60] sm:$0xf]
  %v46 = vld [vmem:[%s1 + $0x64] sm:$0xf]
  %v47 = vld [vmem:[%s1 + $0x68] sm:$0xf]
  %v48 = vld [vmem:[%s1 + $0x6c] sm:$0xf]
  %v49 = vld [vmem:[%s1 + $0x70] sm:$0xf]
  %v50 = vld [vmem:[%s1 + $0x74] sm:$0xf]
  %v51 = vld [vmem:[%s1 + $0x78] sm:$0xf]
  %v52 = vld [vmem:[%s1 + $0x7c] sm:$0xf]
  %v53 = vld [vmem:[%s1 + $0x80] sm:$0xf]
  %v54 = vld [vmem:[%s1 + $0x84] sm:$0xf]
  %v55 = vld [vmem:[%s1 + $0x88] sm:$0xf]
  %v56 = vld [vmem:[%s1 + $0x8c] sm:$0xf]
  %v57 = vld [vmem:[%s2] sm:$0xff]
  %v58 = vld [vmem:[%s2 + $0x8] sm:$0xff]
  %v59 = vld [vmem:[%s2 + $0x10] sm:$0x3]
  %61 = vset.pattern.permute.xlu0 0
  %62 = vperm.xlu0 %61, %v57
  %v63 = vpop.permute.xlu0 %62
  %66 = vset.pattern.permute.xlu0 0
  %67 = vperm.xlu0 %66, %v58
  %v68 = vpop.permute.xlu0 %67
  %71 = vset.pattern.permute.xlu0 0
  %72 = vperm.xlu0 %71, %v59
  %v73 = vpop.permute.xlu0 %72
  %v81 = vunpack.c.l.b16 %v15
  %v82 = vunpack.c.h.b16 %v15
  %v83 = vunpack.c.l.b16 %v16
  %v84 = vunpack.c.l.b16 %v17
  %v85 = vunpack.c.h.b16 %v17
  %v86 = vunpack.c.l.b16 %v18
  %v87 = vunpack.c.l.b16 %v19
  %v88 = vunpack.c.h.b16 %v19
  %v89 = vunpack.c.l.b16 %v20
  %v90 = vpack.c.b16 %v84, %v81
  %v91 = vpack.c.b16 %v85, %v82
  %v92 = vpack.c.b16 %v86, %v83
  %v93 = vpack.c.b16 %v87, %v87
  %v94 = vpack.c.b16 %v88, %v88
  %v95 = vpack.c.b16 %v89, %v89
  %v136 = vunpack.c.l.b16 %v21
  %v137 = vunpack.c.l.b16 %v22
  %v138 = vunpack.c.l.b16 %v23
  %v139 = vunpack.c.l.b16 %v24
  %v140 = vunpack.c.l.b16 %v25
  %v141 = vunpack.c.l.b16 %v26
  %v142 = vunpack.c.l.b16 %v27
  %v143 = vunpack.c.l.b16 %v28
  %v144 = vunpack.c.l.b16 %v29
  %v145 = vunpack.c.l.b16 %v30
  %v146 = vunpack.c.l.b16 %v31
  %v147 = vunpack.c.l.b16 %v32
  %v148 = vunpack.c.l.b16 %v33
  %v149 = vunpack.c.l.b16 %v34
  %v150 = vunpack.c.l.b16 %v35
  %v151 = vunpack.c.l.b16 %v36
  %v152 = vunpack.c.l.b16 %v37
  %v153 = vunpack.c.l.b16 %v38
  %v154 = vunpack.c.l.b16 %v39
  %v155 = vunpack.c.l.b16 %v40
  %v156 = vunpack.c.l.b16 %v41
  %v157 = vunpack.c.l.b16 %v42
  %v158 = vunpack.c.l.b16 %v43
  %v159 = vunpack.c.l.b16 %v44
  %v160 = vunpack.c.l.b16 %v45
  %v161 = vunpack.c.l.b16 %v46
  %v162 = vunpack.c.l.b16 %v47
  %v163 = vunpack.c.l.b16 %v48
  %v164 = vunpack.c.l.b16 %v49
  %v165 = vunpack.c.l.b16 %v50
  %v166 = vunpack.c.l.b16 %v51
  %v167 = vunpack.c.l.b16 %v52
  %v168 = vunpack.c.l.b16 %v53
  %v169 = vunpack.c.l.b16 %v54
  %v170 = vunpack.c.l.b16 %v55
  %v171 = vunpack.c.l.b16 %v56
  %v172 = vpack.c.b16 %v137, %v136
  %v173 = vpack.c.b16 %v139, %v138
  %v174 = vpack.c.b16 %v141, %v140
  %v175 = vpack.c.b16 %v143, %v142
  %v176 = vpack.c.b16 %v145, %v144
  %v177 = vpack.c.b16 %v147, %v146
  %v178 = vpack.c.b16 %v149, %v148
  %v179 = vpack.c.b16 %v151, %v150
  %v180 = vpack.c.b16 %v153, %v152
  %v181 = vpack.c.b16 %v155, %v154
  %v182 = vpack.c.b16 %v157, %v156
  %v183 = vpack.c.b16 %v159, %v158
  %v184 = vpack.c.b16 %v161, %v160
  %v185 = vpack.c.b16 %v163, %v162
  %v186 = vpack.c.b16 %v165, %v164
  %v187 = vpack.c.b16 %v167, %v166
  %v188 = vpack.c.b16 %v169, %v168
  %v189 = vpack.c.b16 %v171, %v170
  %vm208 = vcmask 261120
  %v210 = vsel %vm208, %v92, 0
  %v213 = vsel %vm208, %v95, 0
  %215 = vmatprep.subr.bf16.mxu0 0
  %216 = vmatpush1.bf16.msra.mxu0 %v172
  %217 = vmatprep.subr.bf16.mxu0 0
  %218 = vmatpush1.bf16.msra.mxu0 %v173
  %219 = vmatprep.subr.bf16.mxu0 0
  %220 = vmatpush1.bf16.msra.mxu0 %v174
  %221 = vmatprep.subr.bf16.mxu0 0
  %222 = vmatpush1.bf16.msra.mxu0 %v175
  %223 = vmatprep.subr.bf16.mxu0 0
  %224 = vmatpush1.bf16.msra.mxu0 %v176
  %225 = vmatprep.subr.bf16.mxu0 0
  %226 = vmatpush1.bf16.msra.mxu0 %v177
  %227 = vmatprep.subr.bf16.mxu0 0
  %228 = vmatpush1.bf16.msra.mxu0 %v178
  %229 = vmatprep.subr.bf16.mxu0 0
  %230 = vmatpush1.bf16.msra.mxu0 %v179
  %231 = vmatprep.subr.bf16.mxu0 0
  %232 = vmatpush1.bf16.msra.mxu0 %v180
  %233 = vmatprep.subr.bf16.mxu0 0
  %234 = vmatpush1.bf16.msra.mxu0 %v181
  %235 = vmatprep.subr.bf16.mxu0 0
  %236 = vmatpush1.bf16.msra.mxu0 %v182
  %237 = vmatprep.subr.bf16.mxu0 0
  %238 = vmatpush1.bf16.msra.mxu0 %v183
  %239 = vmatprep.subr.bf16.mxu0 0
  %240 = vmatpush1.bf16.msra.mxu0 %v184
  %241 = vmatprep.subr.bf16.mxu0 0
  %242 = vmatpush1.bf16.msra.mxu0 %v185
  %243 = vmatprep.subr.bf16.mxu0 0
  %244 = vmatpush1.bf16.msra.mxu0 %v186
  %245 = vmatprep.subr.bf16.mxu0 0
  %246 = vmatpush1.bf16.msra.mxu0 %v187
  %247 = vmatprep.mubr.bf16.mxu0 %v91
  %248 = vmatmul.mubr.bf16.gmra.mrb[0].mxu0 %v90
  %v249 = vpop.f32.mrb[0].mxu0
  %v250 = vadd.f32 %v63, %v249
  %v251 = vpop.f32.mrb[0].mxu0
  %v252 = vpop.f32.mrb[0].mxu0
  %v253 = vadd.f32 %v68, %v252
  %v254 = vpop.f32.mrb[0].mxu0
  %255 = vmatprep.mubr.bf16.mxu0 %v94
  %256 = vmatmul.mubr.bf16.gmra.mrb[0].mxu0 %v93
  %v257 = vpop.f32.mrb[0].mxu0
  %v258 = vadd.f32 %v73, %v257
  %v259 = vpop.f32.mrb[0].mxu0
  %v260 = vpop.f32.mrb[0].mxu0
  %v261 = vpop.f32.mrb[0].mxu0
  %262 = vdwg.mxu0
  %263 = vmatprep.subr.bf16.mxu0 0
  %264 = vmatpush1.bf16.msra.mxu0 %v188
  %265 = vmatprep.subr.bf16.mxu0 0
  %266 = vmatpush1.bf16.msra.mxu0 %v189
  %267 = vmatprep.subr.bf16.mxu0 0
  %268 = vmatpush1.bf16.msra.mxu0 0
  %269 = vmatprep.subr.bf16.mxu0 0
  %270 = vmatpush1.bf16.msra.mxu0 0
  %271 = vmatprep.subr.bf16.mxu0 0
  %272 = vmatpush1.bf16.msra.mxu0 0
  %273 = vmatprep.subr.bf16.mxu0 0
  %274 = vmatpush1.bf16.msra.mxu0 0
  %275 = vmatprep.subr.bf16.mxu0 0
  %276 = vmatpush1.bf16.msra.mxu0 0
  %277 = vmatprep.subr.bf16.mxu0 0
  %278 = vmatpush1.bf16.msra.mxu0 0
  %279 = vmatprep.subr.bf16.mxu0 0
  %280 = vmatpush1.bf16.msra.mxu0 0
  %281 = vmatprep.subr.bf16.mxu0 0
  %282 = vmatpush1.bf16.msra.mxu0 0
  %283 = vmatprep.subr.bf16.mxu0 0
  %284 = vmatpush1.bf16.msra.mxu0 0
  %285 = vmatprep.subr.bf16.mxu0 0
  %286 = vmatpush1.bf16.msra.mxu0 0
  %287 = vmatprep.subr.bf16.mxu0 0
  %288 = vmatpush1.bf16.msra.mxu0 0
  %289 = vmatprep.subr.bf16.mxu0 0
  %290 = vmatpush1.bf16.msra.mxu0 0
  %291 = vmatprep.subr.bf16.mxu0 0
  %292 = vmatpush1.bf16.msra.mxu0 0
  %293 = vmatprep.subr.bf16.mxu0 0
  %294 = vmatpush1.bf16.msra.mxu0 0
  %295 = vmatprep.mubr.bf16.mxu0 0
  %296 = vmatmul.mubr.bf16.gmra.mrb[0].mxu0 %v210
  %v297 = vpop.f32.mrb[0].mxu0
  %v298 = vadd.f32 %v250, %v297
  %v299 = vpop.f32.mrb[0].mxu0
  %v300 = vpop.f32.mrb[0].mxu0
  %v301 = vadd.f32 %v253, %v300
  %v302 = vpop.f32.mrb[0].mxu0
  %303 = vmatprep.mubr.bf16.mxu0 0
  %304 = vmatmul.mubr.bf16.gmra.mrb[0].mxu0 %v213
  %v305 = vpop.f32.mrb[0].mxu0
  %v306 = vadd.f32 %v258, %v305
  %v307 = vpop.f32.mrb[0].mxu0
  %v308 = vpop.f32.mrb[0].mxu0
  %v309 = vpop.f32.mrb[0].mxu0
  %310 = vdwg.mxu0
  %v311 = vlaneseq
  %v312 = vshrl.u32 %v311, 7
  %v313 = vadd.s32 %v312, 8
  %v314 = vadd.s32 %v312, 16
  %vm315 = vcmp.ge.s32.totalorder %v312, 8
  %vm316 = vcmp.ge.s32.totalorder %v313, 8
  %vm317 = vcmp.ge.s32.totalorder %v314, 8
  %vm318 = vcmp.lt.s32.totalorder %v312, 13
  %vm319 = vcmp.lt.s32.totalorder %v313, 13
  %vm320 = vcmp.lt.s32.totalorder %v314, 13
  %vm321 = vmand %vm315, %vm318
  %vm322 = vmand %vm316, %vm319
  %vm323 = vmand %vm317, %vm320
  %v324 = vsel %vm321, %v298, -inf
  %v325 = vsel %vm322, %v301, -inf
  %v326 = vsel %vm323, %v306, -inf
  %vm327 = vcmask 1041408
  %v328 = vsel %vm327, %v326, -inf
  %v329 = vmax.f32 %v324, %v325
  %v330 = vmax.f32 %v329, %v328
  %v331 = vrot.slane %v330, 4
  %v332 = vmax.f32 %v330, %v331
  %v333 = vrot.slane %v332, 2
  %v334 = vmax.f32 %v332, %v333
  %v335 = vrot.slane %v334, 1
  %v336 = vmax.f32 %v334, %v335
  %v337 = vsub.f32 %v298, %v336
  %v338 = vsub.f32 %v301, %v336
  %v339 = vsub.f32 %v306, %v336
  %v340 = vsel %vm321, %v337, 0.0
  %v341 = vsel %vm322, %v338, 0.0
  %v342 = vsel %vm323, %v339, 0.0
  %v343 = vmul.f32 %v340, 1.442695
  %v344 = vpow.pop %v343
  %v345 = vmul.f32 %v341, 1.442695
  %v346 = vpow.pop %v345
  %v347 = vmul.f32 %v342, 1.442695
  %v348 = vpow.pop %v347
  %v349 = vsel %vm321, %v344, 0.0
  %v350 = vsel %vm322, %v346, 0.0
  %v351 = vsel %vm323, %v348, 0.0
  %v352 = vadd.f32 %v349, %v350
  %v353 = vsel %vm327, %v351, 0.0
  %v354 = vadd.f32 %v352, %v353
  %v355 = vrot.slane %v354, 4
  %v356 = vadd.f32 %v354, %v355
  %v357 = vrot.slane %v356, 2
  %v358 = vadd.f32 %v356, %v357
  %v359 = vrot.slane %v358, 1
  %v360 = vadd.f32 %v358, %v359
  %v361 = vrcp.pop %v360
  %v362 = vmul.f32 %v349, %v361
  %v363 = vmul.f32 %v350, %v361
  %v364 = vmul.f32 %v351, %v361
  %v365 = vsel %vm321, %v362, %v298
  %v366 = vsel %vm322, %v363, %v301
  %v367 = vsel %vm323, %v364, %v306
  %vm368 = vcmp.ge.s32.totalorder %v312, 13
  %vm369 = vcmp.ge.s32.totalorder %v313, 13
  %vm370 = vcmp.ge.s32.totalorder %v314, 13
  %vm371 = vcmp.lt.s32.totalorder %v312, 18
  %vm372 = vcmp.lt.s32.totalorder %v313, 18
  %vm373 = vcmp.lt.s32.totalorder %v314, 18
  %vm374 = vmand %vm368, %vm371
  %vm375 = vmand %vm369, %vm372
  %vm376 = vmand %vm370, %vm373
  %v377 = vsel %vm374, %v298, -inf
  %v378 = vsel %vm375, %v301, -inf
  %v379 = vsel %vm376, %v306, -inf
  %v380 = vsel %vm327, %v379, -inf
  %v381 = vmax.f32 %v377, %v378
  %v382 = vmax.f32 %v381, %v380
  %v383 = vrot.slane %v382, 4
  %v384 = vmax.f32 %v382, %v383
  %v385 = vrot.slane %v384, 2
  %v386 = vmax.f32 %v384, %v385
  %v387 = vrot.slane %v386, 1
  %v388 = vmax.f32 %v386, %v387
  %v389 = vsub.f32 %v298, %v388
  %v390 = vsub.f32 %v301, %v388
  %v391 = vsub.f32 %v306, %v388
  %v392 = vsel %vm374, %v389, 0.0
  %v393 = vsel %vm375, %v390, 0.0
  %v394 = vsel %vm376, %v391, 0.0
  %v395 = vmul.f32 %v392, 1.442695
  %v396 = vpow.pop %v395
  %v397 = vmul.f32 %v393, 1.442695
  %v398 = vpow.pop %v397
  %v399 = vmul.f32 %v394, 1.442695
  %v400 = vpow.pop %v399
  %v401 = vsel %vm374, %v396, 0.0
  %v402 = vsel %vm375, %v398, 0.0
  %v403 = vsel %vm376, %v400, 0.0
  %v404 = vadd.f32 %v401, %v402
  %v405 = vsel %vm327, %v403, 0.0
  %v406 = vadd.f32 %v404, %v405
  %v407 = vrot.slane %v406, 4
  %v408 = vadd.f32 %v406, %v407
  %v409 = vrot.slane %v408, 2
  %v410 = vadd.f32 %v408, %v409
  %v411 = vrot.slane %v410, 1
  %v412 = vadd.f32 %v410, %v411
  %v413 = vrcp.pop %v412
  %v414 = vmul.f32 %v401, %v413
  %v415 = vmul.f32 %v402, %v413
  %v416 = vmul.f32 %v403, %v413
  %v417 = vsel %vm374, %v414, %v365
  %v418 = vsel %vm375, %v415, %v366
  %v419 = vsel %vm376, %v416, %v367
  %420 = vst [vmem:[%s3] sm:$0xff] %v417
  %421 = vst [vmem:[%s3 + $0x8] sm:$0xff] %v418
  %422 = vst [vmem:[%s3 + $0x10] sm:$0x3] %v419
  // Predicated region
  $region14: #{yolo_forward.13} parent=0 // pred_check
    _
  $region15: #{yolo_forward.13} parent=0 // pred_check_branch
    %424 = sbr.rel (0) target = $region17
  $region16: #{yolo_forward.13} parent=0 // pred_region
    _
  $region17: #{yolo_forward.13} parent=0 // pred_fallthru
    _
  // Predicated region
  $region18: #{yolo_forward.13} parent=0 // pred_check
    _
  $region19: #{yolo_forward.13} parent=0 // pred_check_branch
    %426 = sbr.rel (0) target = $region21
  $region20: #{yolo_forward.13} parent=0 // pred_region
    _
  $region21: #{yolo_forward.13} parent=0 // pred_fallthru
    _

// kernel: yolo_forward.12
$region0: #{yolo_forward.12}
  #allocation0 [shape = 'u32[]', space=smem, size = 0x4, offset = 0x4, fixed_abs, tag = 'smem constant byte address 0x4 - core index']
  #allocation1 [shape = 'u32[144,128]{1,0:T(1,128)}', space=vmem, size = 0x12000, scoped, tag = 'internal scratch']
  %s0 = inlined_call_operand.vmem [shape: bf16[18,144], index: 0, kind: input, shape index: {}]
  %s1 = inlined_call_operand.vmem [shape: bf16[144,128], index: 1, kind: input, shape index: {}]
  %s2 = inlined_call_operand.vmem [shape: f32[18,1], index: 2, kind: input, shape index: {}]
  %s3 = inlined_call_operand.vmem [shape: f32[18,128], index: 3, kind: output, shape index: {}]
  %s4 = sld [smem:[#allocation0]]
  $region22: #{yolo_forward.12} parent=0
    _
  %s6 = ssub.s32 1, %s4
  %s7 = scalar_select 0, %s6, %s4
  // Predicated region
  $region2: #{yolo_forward.12} parent=0 // pred_check
    _
  $region3: #{yolo_forward.12} parent=0 // pred_check_branch
    %9 = sbr.rel (0) target = $region5
  $region4: #{yolo_forward.12} parent=0 // pred_region
    _
  $region5: #{yolo_forward.12} parent=0 // pred_fallthru
    _
  // Predicated region
  $region6: #{yolo_forward.12} parent=0 // pred_check
    _
  $region7: #{yolo_forward.12} parent=0 // pred_check_branch
    %11 = sbr.rel (0) target = $region9
  $region8: #{yolo_forward.12} parent=0 // pred_region
    _
  $region9: #{yolo_forward.12} parent=0 // pred_fallthru
    _
  // Predicated region
  $region10: #{yolo_forward.12} parent=0 // pred_check
    _
  $region11: #{yolo_forward.12} parent=0 // pred_check_branch
    %13 = sbr.rel (0) target = $region13
  $region12: #{yolo_forward.12} parent=0 // pred_region
    _
  $region13: #{yolo_forward.12} parent=0 // pred_fallthru
    _
  %v15 = vld [vmem:[%s0] sm:$0xff]
  %v16 = vld [vmem:[%s0 + $0x8] sm:$0xff]
  %v17 = vld [vmem:[%s0 + $0x10] sm:$0x11]
  %v18 = vld [vmem:[%s1] sm:$0xf]
  %v19 = vld [vmem:[%s1 + $0x4] sm:$0xf]
  %v20 = vld [vmem:[%s1 + $0x8] sm:$0xf]
  %v21 = vld [vmem:[%s1 + $0xc] sm:$0xf]
  %v22 = vld [vmem:[%s1 + $0x10] sm:$0xf]
  %v23 = vld [vmem:[%s1 + $0x14] sm:$0xf]
  %v24 = vld [vmem:[%s1 + $0x18] sm:$0xf]
  %v25 = vld [vmem:[%s1 + $0x1c] sm:$0xf]
  %v26 = vld [vmem:[%s1 + $0x20] sm:$0xf]
  %v27 = vld [vmem:[%s1 + $0x24] sm:$0xf]
  %v28 = vld [vmem:[%s1 + $0x28] sm:$0xf]
  %v29 = vld [vmem:[%s1 + $0x2c] sm:$0xf]
  %v30 = vld [vmem:[%s1 + $0x30] sm:$0xf]
  %v31 = vld [vmem:[%s1 + $0x34] sm:$0xf]
  %v32 = vld [vmem:[%s1 + $0x38] sm:$0xf]
  %v33 = vld [vmem:[%s1 + $0x3c] sm:$0xf]
  %v34 = vld [vmem:[%s1 + $0x40] sm:$0xf]
  %v35 = vld [vmem:[%s1 + $0x44] sm:$0xf]
  %v36 = vld [vmem:[%s2] sm:$0xff]
  %v37 = vld [vmem:[%s2 + $0x8] sm:$0xff]
  %v38 = vld [vmem:[%s2 + $0x10] sm:$0x3]
  %40 = vset.pattern.permute.xlu0 0
  %41 = vperm.xlu0 %40, %v36
  %v42 = vpop.permute.xlu0 %41
  %45 = vset.pattern.permute.xlu0 0
  %46 = vperm.xlu0 %45, %v37
  %v47 = vpop.permute.xlu0 %46
  %50 = vset.pattern.permute.xlu0 0
  %51 = vperm.xlu0 %50, %v38
  %v52 = vpop.permute.xlu0 %51
  %v57 = vunpack.c.l.b16 %v15
  %v58 = vunpack.c.h.b16 %v15
  %v59 = vunpack.c.l.b16 %v16
  %v60 = vunpack.c.h.b16 %v16
  %v61 = vunpack.c.l.b16 %v17
  %v62 = vunpack.c.h.b16 %v17
  %v63 = vpack.c.b16 %v59, %v57
  %v64 = vpack.c.b16 %v60, %v58
  %v65 = vpack.c.b16 %v61, %v61
  %v66 = vpack.c.b16 %v62, %v62
  %v87 = vunpack.c.l.b16 %v18
  %v88 = vunpack.c.l.b16 %v19
  %v89 = vunpack.c.l.b16 %v20
  %v90 = vunpack.c.l.b16 %v21
  %v91 = vunpack.c.l.b16 %v22
  %v92 = vunpack.c.l.b16 %v23
  %v93 = vunpack.c.l.b16 %v24
  %v94 = vunpack.c.l.b16 %v25
  %v95 = vunpack.c.l.b16 %v26
  %v96 = vunpack.c.l.b16 %v27
  %v97 = vunpack.c.l.b16 %v28
  %v98 = vunpack.c.l.b16 %v29
  %v99 = vunpack.c.l.b16 %v30
  %v100 = vunpack.c.l.b16 %v31
  %v101 = vunpack.c.l.b16 %v32
  %v102 = vunpack.c.l.b16 %v33
  %v103 = vunpack.c.l.b16 %v34
  %v104 = vunpack.c.l.b16 %v35
  %v105 = vpack.c.b16 %v88, %v87
  %v106 = vpack.c.b16 %v90, %v89
  %v107 = vpack.c.b16 %v92, %v91
  %v108 = vpack.c.b16 %v94, %v93
  %v109 = vpack.c.b16 %v96, %v95
  %v110 = vpack.c.b16 %v98, %v97
  %v111 = vpack.c.b16 %v100, %v99
  %v112 = vpack.c.b16 %v102, %v101
  %v113 = vpack.c.b16 %v104, %v103
  %vm123 = vcmask 130048
  %v125 = vsel %vm123, %v64, 0
  %v128 = vsel %vm123, %v66, 0
  %130 = vmatprep.subr.bf16.mxu0 0
  %131 = vmatpush1.bf16.msra.mxu0 %v105
  %132 = vmatprep.subr.bf16.mxu0 0
  %133 = vmatpush1.bf16.msra.mxu0 %v106
  %134 = vmatprep.subr.bf16.mxu0 0
  %135 = vmatpush1.bf16.msra.mxu0 %v107
  %136 = vmatprep.subr.bf16.mxu0 0
  %137 = vmatpush1.bf16.msra.mxu0 %v108
  %138 = vmatprep.subr.bf16.mxu0 0
  %139 = vmatpush1.bf16.msra.mxu0 %v109
  %140 = vmatprep.subr.bf16.mxu0 0
  %141 = vmatpush1.bf16.msra.mxu0 %v110
  %142 = vmatprep.subr.bf16.mxu0 0
  %143 = vmatpush1.bf16.msra.mxu0 %v111
  %144 = vmatprep.subr.bf16.mxu0 0
  %145 = vmatpush1.bf16.msra.mxu0 %v112
  %146 = vmatprep.subr.bf16.mxu0 0
  %147 = vmatpush1.bf16.msra.mxu0 %v113
  %148 = vmatprep.subr.bf16.mxu0 0
  %149 = vmatpush1.bf16.msra.mxu0 0
  %150 = vmatprep.subr.bf16.mxu0 0
  %151 = vmatpush1.bf16.msra.mxu0 0
  %152 = vmatprep.subr.bf16.mxu0 0
  %153 = vmatpush1.bf16.msra.mxu0 0
  %154 = vmatprep.subr.bf16.mxu0 0
  %155 = vmatpush1.bf16.msra.mxu0 0
  %156 = vmatprep.subr.bf16.mxu0 0
  %157 = vmatpush1.bf16.msra.mxu0 0
  %158 = vmatprep.subr.bf16.mxu0 0
  %159 = vmatpush1.bf16.msra.mxu0 0
  %160 = vmatprep.subr.bf16.mxu0 0
  %161 = vmatpush1.bf16.msra.mxu0 0
  %162 = vmatprep.mubr.bf16.mxu0 %v125
  %163 = vmatmul.mubr.bf16.gmra.mrb[0].mxu0 %v63
  %v164 = vpop.f32.mrb[0].mxu0
  %v165 = vadd.f32 %v42, %v164
  %v166 = vpop.f32.mrb[0].mxu0
  %v167 = vpop.f32.mrb[0].mxu0
  %v168 = vadd.f32 %v47, %v167
  %v169 = vpop.f32.mrb[0].mxu0
  %170 = vmatprep.mubr.bf16.mxu0 %v128
  %171 = vmatmul.mubr.bf16.gmra.mrb[0].mxu0 %v65
  %v172 = vpop.f32.mrb[0].mxu0
  %v173 = vadd.f32 %v52, %v172
  %v174 = vpop.f32.mrb[0].mxu0
  %v175 = vpop.f32.mrb[0].mxu0
  %v176 = vpop.f32.mrb[0].mxu0
  %177 = vdwg.mxu0
  %v178 = vlaneseq
  %v179 = vshrl.u32 %v178, 7
  %v180 = vadd.s32 %v179, 8
  %v181 = vadd.s32 %v179, 16
  %vm182 = vcmp.ge.s32.totalorder %v179, 8
  %vm183 = vcmp.ge.s32.totalorder %v180, 8
  %vm184 = vcmp.ge.s32.totalorder %v181, 8
  %vm185 = vcmp.lt.s32.totalorder %v179, 13
  %vm186 = vcmp.lt.s32.totalorder %v180, 13
  %vm187 = vcmp.lt.s32.totalorder %v181, 13
  %vm188 = vmand %vm182, %vm185
  %vm189 = vmand %vm183, %vm186
  %vm190 = vmand %vm184, %vm187
  %v191 = vsel %vm188, %v165, -inf
  %v192 = vsel %vm189, %v168, -inf
  %v193 = vsel %vm190, %v173, -inf
  %vm194 = vcmask 1041408
  %v195 = vsel %vm194, %v193, -inf
  %v196 = vmax.f32 %v191, %v192
  %v197 = vmax.f32 %v196, %v195
  %v198 = vrot.slane %v197, 4
  %v199 = vmax.f32 %v197, %v198
  %v200 = vrot.slane %v199, 2
  %v201 = vmax.f32 %v199, %v200
  %v202 = vrot.slane %v201, 1
  %v203 = vmax.f32 %v201, %v202
  %v204 = vsub.f32 %v165, %v203
  %v205 = vsub.f32 %v168, %v203
  %v206 = vsub.f32 %v173, %v203
  %v207 = vsel %vm188, %v204, 0.0
  %v208 = vsel %vm189, %v205, 0.0
  %v209 = vsel %vm190, %v206, 0.0
  %v210 = vmul.f32 %v207, 1.442695
  %v211 = vpow.pop %v210
  %v212 = vmul.f32 %v208, 1.442695
  %v213 = vpow.pop %v212
  %v214 = vmul.f32 %v209, 1.442695
  %v215 = vpow.pop %v214
  %v216 = vsel %vm188, %v211, 0.0
  %v217 = vsel %vm189, %v213, 0.0
  %v218 = vsel %vm190, %v215, 0.0
  %v219 = vadd.f32 %v216, %v217
  %v220 = vsel %vm194, %v218, 0.0
  %v221 = vadd.f32 %v219, %v220
  %v222 = vrot.slane %v221, 4
  %v223 = vadd.f32 %v221, %v222
  %v224 = vrot.slane %v223, 2
  %v225 = vadd.f32 %v223, %v224
  %v226 = vrot.slane %v225, 1
  %v227 = vadd.f32 %v225, %v226
  %v228 = vrcp.pop %v227
  %v229 = vmul.f32 %v216, %v228
  %v230 = vmul.f32 %v217, %v228
  %v231 = vmul.f32 %v218, %v228
  %v232 = vsel %vm188, %v229, %v165
  %v233 = vsel %vm189, %v230, %v168
  %v234 = vsel %vm190, %v231, %v173
  %vm235 = vcmp.ge.s32.totalorder %v179, 13
  %vm236 = vcmp.ge.s32.totalorder %v180, 13
  %vm237 = vcmp.ge.s32.totalorder %v181, 13
  %vm238 = vcmp.lt.s32.totalorder %v179, 18
  %vm239 = vcmp.lt.s32.totalorder %v180, 18
  %vm240 = vcmp.lt.s32.totalorder %v181, 18
  %vm241 = vmand %vm235, %vm238
  %vm242 = vmand %vm236, %vm239
  %vm243 = vmand %vm237, %vm240
  %v244 = vsel %vm241, %v165, -inf
  %v245 = vsel %vm242, %v168, -inf
  %v246 = vsel %vm243, %v173, -inf
  %v247 = vsel %vm194, %v246, -inf
  %v248 = vmax.f32 %v244, %v245
  %v249 = vmax.f32 %v248, %v247
  %v250 = vrot.slane %v249, 4
  %v251 = vmax.f32 %v249, %v250
  %v252 = vrot.slane %v251, 2
  %v253 = vmax.f32 %v251, %v252
  %v254 = vrot.slane %v253, 1
  %v255 = vmax.f32 %v253, %v254
  %v256 = vsub.f32 %v165, %v255
  %v257 = vsub.f32 %v168, %v255
  %v258 = vsub.f32 %v173, %v255
  %v259 = vsel %vm241, %v256, 0.0
  %v260 = vsel %vm242, %v257, 0.0
  %v261 = vsel %vm243, %v258, 0.0
  %v262 = vmul.f32 %v259, 1.442695
  %v263 = vpow.pop %v262
  %v264 = vmul.f32 %v260, 1.442695
  %v265 = vpow.pop %v264
  %v266 = vmul.f32 %v261, 1.442695
  %v267 = vpow.pop %v266
  %v268 = vsel %vm241, %v263, 0.0
  %v269 = vsel %vm242, %v265, 0.0
  %v270 = vsel %vm243, %v267, 0.0
  %v271 = vadd.f32 %v268, %v269
  %v272 = vsel %vm194, %v270, 0.0
  %v273 = vadd.f32 %v271, %v272
  %v274 = vrot.slane %v273, 4
  %v275 = vadd.f32 %v273, %v274
  %v276 = vrot.slane %v275, 2
  %v277 = vadd.f32 %v275, %v276
  %v278 = vrot.slane %v277, 1
  %v279 = vadd.f32 %v277, %v278
  %v280 = vrcp.pop %v279
  %v281 = vmul.f32 %v268, %v280
  %v282 = vmul.f32 %v269, %v280
  %v283 = vmul.f32 %v270, %v280
  %v284 = vsel %vm241, %v281, %v232
  %v285 = vsel %vm242, %v282, %v233
  %v286 = vsel %vm243, %v283, %v234
  %287 = vst [vmem:[%s3] sm:$0xff] %v284
  %288 = vst [vmem:[%s3 + $0x8] sm:$0xff] %v285
  %289 = vst [vmem:[%s3 + $0x10] sm:$0x3] %v286
  // Predicated region
  $region14: #{yolo_forward.12} parent=0 // pred_check
    _
  $region15: #{yolo_forward.12} parent=0 // pred_check_branch
    %291 = sbr.rel (0) target = $region17
  $region16: #{yolo_forward.12} parent=0 // pred_region
    _
  $region17: #{yolo_forward.12} parent=0 // pred_fallthru
    _
  // Predicated region
  $region18: #{yolo_forward.12} parent=0 // pred_check
    _
  $region19: #{yolo_forward.12} parent=0 // pred_check_branch
    %293 = sbr.rel (0) target = $region21
  $region20: #{yolo_forward.12} parent=0 // pred_region
    _
  $region21: #{yolo_forward.12} parent=0 // pred_fallthru
    _

</llo_original>
